<compile_context>
chip_gen: v5e
topology: v5e:2x2
jax: 0.10.0
libtpu: 0.0.40
codegen_flags: <defaults>
</compile_context>

<pallas_src>
import functools

import jax
import jax.numpy as jnp
from jax import lax
from jax.experimental import pallas as pl
from jax.experimental.pallas import tpu as pltpu


# MXU operand dtype.  jnp.bfloat16 doubles the MXU rate on v6e/v7x (f32
# accumulation is kept either way), but rounding compounds across the 12
# chained convs and can exceed the 2e-3 check vs. the f32 reference, so the
# default stays f32.  Flip to jnp.bfloat16 for throughput on v6e/v7x.
_MM_DTYPE = jnp.float32


# --------------------------- fused forward kernel ----------------------------

def _kutta_nys56_kernel(x_ref, w_ref, s_ref, b_ref, o_ref, *, H, W, C):
    """One grid step == one image; everything stays in VMEM/vregs.

    x_ref : (1, H, W*C)        lane-dense activation slab (NHWC flattened)
    w_ref : (12, 3*W*C, W*C)   banded (Toeplitz-in-W) conv weights
    s_ref : (12, W*C)          folded-BN scale, tiled to lane width
    b_ref : (12, W*C)          folded-BN bias,  tiled to lane width
    o_ref : (1, H, W*C)
    """
    WC = W * C
    f32 = jnp.float32

    x = x_ref[0].astype(f32)                       # (H, WC)
    s_all = s_ref[...]                             # (12, WC)
    b_all = b_ref[...]                             # (12, WC)
    zrow = jnp.zeros((1, WC), f32)

    def bn_relu(a, i):                             # folded inference BN + ReLU
        return jnp.maximum(a * s_all[i:i + 1, :] + b_all[i:i + 1, :], 0.0)

    def conv3x3(a, i):
        # 1-row halo in H; the W halo is already folded into the banded weight.
        ap = jnp.concatenate([zrow, a, zrow], axis=0)                  # (H+2, WC)
        band = jnp.concatenate(
            [ap[0:H, :], ap[1:H + 1, :], ap[2:H + 2, :]], axis=1)      # (H, 3*WC)
        return jnp.dot(band.astype(w_ref.dtype), w_ref[i],
                       preferred_element_type=f32)                     # (H, WC)

    def unit(a, i):   # conv_{2i}(relu(bn_{2i}(conv_{2i-1}(relu(bn_{2i-1}(a))))))
        a = conv3x3(bn_relu(a, 2 * i - 2), 2 * i - 2)
        return conv3x3(bn_relu(a, 2 * i - 1), 2 * i - 1)

    sc = x
    k1 = unit(x, 1)
    k2 = unit(1.0 / 3.0 * k1 + sc, 2)
    k3 = unit(1.0 / 25.0 * (4.0 * k1 + 6.0 * k2) + sc, 3)
    k4 = unit(1.0 / 4.0 * (k1 - 12.0 * k2 + 15.0 * k3) + sc, 4)
    k5 = unit(1.0 / 81.0 * (6.0 * k1 + 90.0 * k2 - 50.0 * k3 + 8.0 * k4) + sc, 5)
    k6 = unit(1.0 / 75.0 * (6.0 * k1 + 36.0 * k2 + 10.0 * k3 + 8.0 * k4) + sc, 6)

    out = (1.0 / 192.0) * (23.0 * k1 + 125.0 * k2 - 81.0 * k5 + 125.0 * k6) + sc
    out = jnp.maximum(out, 0.0)
    o_ref[...] = out.reshape(1, H, WC).astype(o_ref.dtype)


# ------------------------- wrapper-side weight packing -----------------------

def _banded_conv_weight(w_hwio, W):
    """(3,3,Cin,Cout) HWIO conv weight -> (3*W*Cin, W*Cout) banded matmul weight.

    w_band[dy*W*Cin + wi*Cin + ci, wo*Cout + co] =
        w_hwio[dy, wi - wo + 1, ci, co]   if 0 <= wi - wo + 1 < 3 else 0
    so that  out(H, W*Cout) = band(H, 3*W*Cin) @ w_band  reproduces the
    3x3 'same' convolution (the W zero-padding becomes the zero entries).
    """
    Cin, Cout = w_hwio.shape[2], w_hwio.shape[3]
    wi = jnp.arange(W)[:, None]                    # input column
    wo = jnp.arange(W)[None, :]                    # output column
    dx = wi - wo + 1                               # tap index along W
    valid = (dx >= 0) & (dx < 3)
    g = w_hwio[:, jnp.clip(dx, 0, 2), :, :]        # (3, W, W, Cin, Cout)
    g = jnp.where(valid[None, :, :, None, None], g, 0.0)
    g = jnp.transpose(g, (0, 1, 3, 2, 4))          # (3, W, Cin, W, Cout)
    return g.reshape(3 * W * Cin, W * Cout)


# ------------------------------ forward (Pallas) ------------------------------

def kutta_nys56_forward(x, params):
    """x: (N, H, W, C) NHWC float32.  Identity shortcut (stride=1, Cin==Cout)."""
    n, h, w, c = x.shape
    wc = w * c

    # One-time packing of the weights / folded BN into kernel-friendly layouts.
    # In a real model this is done once at weight-load time, not per call.
    w_band = jnp.stack(
        [_banded_conv_weight(params[f"conv{i}_w"], w) for i in range(1, 13)]
    ).astype(_MM_DTYPE)                                          # (12, 3*wc, wc)
    s_t = jnp.stack([jnp.tile(params[f"bn{i}_scale"], w) for i in range(1, 13)])
    b_t = jnp.stack([jnp.tile(params[f"bn{i}_bias"], w) for i in range(1, 13)])

    kern = functools.partial(_kutta_nys56_kernel, H=h, W=w, C=c)
    out = pl.pallas_call(
        kern,
        out_shape=jax.ShapeDtypeStruct((n, h, wc), x.dtype),
        grid=(n,),
        in_specs=[
            pl.BlockSpec((1, h, wc), lambda b: (b, 0, 0)),
            pl.BlockSpec((12, 3 * wc, wc), lambda b: (0, 0, 0)),
            pl.BlockSpec((12, wc), lambda b: (0, 0)),
            pl.BlockSpec((12, wc), lambda b: (0, 0)),
        ],
        out_specs=pl.BlockSpec((1, h, wc), lambda b: (b, 0, 0)),
        compiler_params=pltpu.CompilerParams(
            dimension_semantics=("parallel",)),
    )(x.reshape(n, h, wc), w_band, s_t, b_t)
    return out.reshape(n, h, w, c)


# ----------------------------- pure-JAX reference -----------------------------

def _conv_ref(x, w):
    return lax.conv_general_dilated(
        x, w, window_strides=(1, 1), padding=((1, 1), (1, 1)),
        dimension_numbers=("NHWC", "HWIO", "NHWC"))


def kutta_nys56_ref(x, params):
    sc = x

    def unit(inp, i):
        a = jnp.maximum(inp * params[f"bn{2 * i - 1}_scale"] + params[f"bn{2 * i - 1}_bias"], 0.0)
        a = _conv_ref(a, params[f"conv{2 * i - 1}_w"])
        a = jnp.maximum(a * params[f"bn{2 * i}_scale"] + params[f"bn{2 * i}_bias"], 0.0)
        return _conv_ref(a, params[f"conv{2 * i}_w"])

    k1 = unit(x, 1)
    k2 = unit(1 / 3.0 * k1 + sc, 2)
    k3 = unit(1 / 25.0 * (4.0 * k1 + 6.0 * k2) + sc, 3)
    k4 = unit(1 / 4.0 * (k1 - 12.0 * k2 + 15.0 * k3) + sc, 4)
    k5 = unit(1 / 81.0 * (6.0 * k1 + 90.0 * k2 - 50.0 * k3 + 8.0 * k4) + sc, 5)
    k6 = unit(1 / 75.0 * (6.0 * k1 + 36.0 * k2 + 10.0 * k3 + 8.0 * k4) + sc, 6)
    out = 1 / 192.0 * (23.0 * k1 + 125.0 * k2 - 81.0 * k5 + 125.0 * k6) + sc
    return jnp.maximum(out, 0.0)


# ---------------------------------- params ------------------------------------

def init_params(key, planes):
    """Deterministic synthetic init: 12 conv weights + 12 folded BN (scale, bias)."""
    eps = 1e-5
    params = {}
    keys = jax.random.split(key, 60)
    ki = 0
    for i in range(1, 13):
        params[f"conv{i}_w"] = 0.1 * jax.random.normal(
            keys[ki], (3, 3, planes, planes), jnp.float32); ki += 1
        gamma = 1.0 + 0.1 * jax.random.normal(keys[ki], (planes,), jnp.float32); ki += 1
        beta = 0.1 * jax.random.normal(keys[ki], (planes,), jnp.float32); ki += 1
        mean = 0.1 * jax.random.normal(keys[ki], (planes,), jnp.float32); ki += 1
        var = 0.5 + jax.random.uniform(keys[ki], (planes,), jnp.float32); ki += 1
        scale = gamma / jnp.sqrt(var + eps)
        params[f"bn{i}_scale"] = scale
        params[f"bn{i}_bias"] = beta - mean * scale
    return params


# ----------------------------------- main --------------------------------------

if __name__ == "__main__":
    N, H, W, C = 2, 16, 16, 8          # in_planes == planes == 8, stride == 1
    key = jax.random.PRNGKey(0)
    k_x, k_p = jax.random.split(key)
    x = jax.random.normal(k_x, (N, H, W, C), jnp.float32)   # NHWC
    params = init_params(k_p, C)

    fwd = jax.jit(kutta_nys56_forward)
    out = jax.block_until_ready(fwd(x, params))
    ref = jax.block_until_ready(kutta_nys56_ref(x, params))

    if out.shape != (N, H, W, C):
        raise SystemExit(f"bad output shape {out.shape}")
    if not jnp.allclose(out, ref, rtol=2e-3, atol=2e-3):
        err = float(jnp.max(jnp.abs(out - ref)))
        raise SystemExit(f"mismatch vs pure-JAX reference (max abs err {err})")
    print("KERNEL_OK")
</pallas_src>

<mosaic_0001>
module attributes {stable_mosaic.version = 11 : i64} {
  func.func @_kutta_nys56_kernel(%arg0: i32, %arg1: memref<1x16x128xf32, #tpu.memory_space<vmem>>, %arg2: memref<12x384x128xf32, #tpu.memory_space<vmem>>, %arg3: memref<12x128xf32, #tpu.memory_space<vmem>>, %arg4: memref<12x128xf32, #tpu.memory_space<vmem>>, %arg5: memref<1x16x128xf32, #tpu.memory_space<vmem>>) attributes {dimension_semantics = [#tpu.dimension_semantics<parallel>], iteration_bounds = array<i64: 2>, scalar_prefetch = 0 : i64, scratch_operands = 0 : i64, tpu.core_type = #tpu.core_type<tc>, window_params = [{transform_indices = @transform_0, window_bounds = array<i64: 1, 16, 128>}, {pipeline_mode = #tpu.pipeline_mode<synchronous>, transform_indices = @transform_1, window_bounds = array<i64: 12, 384, 128>}, {pipeline_mode = #tpu.pipeline_mode<synchronous>, transform_indices = @transform_2, window_bounds = array<i64: 12, 128>}, {pipeline_mode = #tpu.pipeline_mode<synchronous>, transform_indices = @transform_3, window_bounds = array<i64: 12, 128>}, {transform_indices = @transform_4, window_bounds = array<i64: 1, 16, 128>}]} {
    %c0 = arith.constant 0 : index
    %c0_0 = arith.constant 0 : index
    %c0_1 = arith.constant 0 : index
    %0 = vector.load %arg1[%c0, %c0_0, %c0_1] : memref<1x16x128xf32, #tpu.memory_space<vmem>>, vector<1x16x128xf32>
    %1 = vector.shape_cast %0 : vector<1x16x128xf32> to vector<16x128xf32>
    %c0_2 = arith.constant 0 : index
    %c0_3 = arith.constant 0 : index
    %2 = vector.load %arg3[%c0_2, %c0_3] : memref<12x128xf32, #tpu.memory_space<vmem>>, vector<12x128xf32>
    %c0_4 = arith.constant 0 : index
    %c0_5 = arith.constant 0 : index
    %3 = vector.load %arg4[%c0_4, %c0_5] : memref<12x128xf32, #tpu.memory_space<vmem>>, vector<12x128xf32>
    %cst = arith.constant 0.000000e+00 : f32
    %4 = vector.broadcast %cst : f32 to vector<1x128xf32>
    %5 = vector.extract_strided_slice %2 {offsets = [0, 0], sizes = [1, 128], strides = [1, 1]} : vector<12x128xf32> to vector<1x128xf32>
    %6 = vector.broadcast %5 : vector<1x128xf32> to vector<16x128xf32>
    %7 = arith.mulf %1, %6 : vector<16x128xf32>
    %8 = vector.extract_strided_slice %3 {offsets = [0, 0], sizes = [1, 128], strides = [1, 1]} : vector<12x128xf32> to vector<1x128xf32>
    %9 = vector.broadcast %8 : vector<1x128xf32> to vector<16x128xf32>
    %10 = arith.addf %7, %9 : vector<16x128xf32>
    %cst_6 = arith.constant 0.000000e+00 : f32
    %11 = vector.broadcast %cst_6 : f32 to vector<16x128xf32>
    %12 = arith.maximumf %10, %11 : vector<16x128xf32>
    %13 = tpu.concatenate %4, %12, %4 in 0 : vector<1x128xf32>, vector<16x128xf32>, vector<1x128xf32> -> vector<18x128xf32>
    %14 = vector.extract_strided_slice %13 {offsets = [0, 0], sizes = [16, 128], strides = [1, 1]} : vector<18x128xf32> to vector<16x128xf32>
    %15 = vector.extract_strided_slice %13 {offsets = [1, 0], sizes = [16, 128], strides = [1, 1]} : vector<18x128xf32> to vector<16x128xf32>
    %16 = vector.extract_strided_slice %13 {offsets = [2, 0], sizes = [16, 128], strides = [1, 1]} : vector<18x128xf32> to vector<16x128xf32>
    %17 = tpu.concatenate %14, %15, %16 in 1 : vector<16x128xf32>, vector<16x128xf32>, vector<16x128xf32> -> vector<16x384xf32>
    %c0_7 = arith.constant 0 : index
    %c0_8 = arith.constant 0 : index
    %c0_9 = arith.constant 0 : index
    %18 = vector.load %arg2[%c0_7, %c0_8, %c0_9] : memref<12x384x128xf32, #tpu.memory_space<vmem>>, vector<1x384x128xf32>
    %19 = vector.shape_cast %18 : vector<1x384x128xf32> to vector<384x128xf32>
    %cst_10 = arith.constant dense<0.000000e+00> : vector<16x128xf32>
    %20 = tpu.matmul %17, %19, %cst_10 {dimension_numbers = #tpu.dot_dimension_numbers<[1], [0], [0], [1], [0, 0, 1, 1], [], []>} : vector<16x384xf32>, vector<384x128xf32>, vector<16x128xf32> -> vector<16x128xf32>
    %21 = vector.extract_strided_slice %2 {offsets = [1, 0], sizes = [1, 128], strides = [1, 1]} : vector<12x128xf32> to vector<1x128xf32>
    %22 = vector.broadcast %21 : vector<1x128xf32> to vector<16x128xf32>
    %23 = arith.mulf %20, %22 : vector<16x128xf32>
    %24 = vector.extract_strided_slice %3 {offsets = [1, 0], sizes = [1, 128], strides = [1, 1]} : vector<12x128xf32> to vector<1x128xf32>
    %25 = vector.broadcast %24 : vector<1x128xf32> to vector<16x128xf32>
    %26 = arith.addf %23, %25 : vector<16x128xf32>
    %cst_11 = arith.constant 0.000000e+00 : f32
    %27 = vector.broadcast %cst_11 : f32 to vector<16x128xf32>
    %28 = arith.maximumf %26, %27 : vector<16x128xf32>
    %29 = tpu.concatenate %4, %28, %4 in 0 : vector<1x128xf32>, vector<16x128xf32>, vector<1x128xf32> -> vector<18x128xf32>
    %30 = vector.extract_strided_slice %29 {offsets = [0, 0], sizes = [16, 128], strides = [1, 1]} : vector<18x128xf32> to vector<16x128xf32>
    %31 = vector.extract_strided_slice %29 {offsets = [1, 0], sizes = [16, 128], strides = [1, 1]} : vector<18x128xf32> to vector<16x128xf32>
    %32 = vector.extract_strided_slice %29 {offsets = [2, 0], sizes = [16, 128], strides = [1, 1]} : vector<18x128xf32> to vector<16x128xf32>
    %33 = tpu.concatenate %30, %31, %32 in 1 : vector<16x128xf32>, vector<16x128xf32>, vector<16x128xf32> -> vector<16x384xf32>
    %c1 = arith.constant 1 : index
    %c0_12 = arith.constant 0 : index
    %c0_13 = arith.constant 0 : index
    %34 = vector.load %arg2[%c1, %c0_12, %c0_13] : memref<12x384x128xf32, #tpu.memory_space<vmem>>, vector<1x384x128xf32>
    %35 = vector.shape_cast %34 : vector<1x384x128xf32> to vector<384x128xf32>
    %cst_14 = arith.constant dense<0.000000e+00> : vector<16x128xf32>
    %36 = tpu.matmul %33, %35, %cst_14 {dimension_numbers = #tpu.dot_dimension_numbers<[1], [0], [0], [1], [0, 0, 1, 1], [], []>} : vector<16x384xf32>, vector<384x128xf32>, vector<16x128xf32> -> vector<16x128xf32>
    %cst_15 = arith.constant 0.333333343 : f32
    %37 = vector.broadcast %cst_15 : f32 to vector<16x128xf32>
    %38 = arith.mulf %37, %36 : vector<16x128xf32>
    %39 = arith.addf %38, %1 : vector<16x128xf32>
    %40 = vector.extract_strided_slice %2 {offsets = [2, 0], sizes = [1, 128], strides = [1, 1]} : vector<12x128xf32> to vector<1x128xf32>
    %41 = vector.broadcast %40 : vector<1x128xf32> to vector<16x128xf32>
    %42 = arith.mulf %39, %41 : vector<16x128xf32>
    %43 = vector.extract_strided_slice %3 {offsets = [2, 0], sizes = [1, 128], strides = [1, 1]} : vector<12x128xf32> to vector<1x128xf32>
    %44 = vector.broadcast %43 : vector<1x128xf32> to vector<16x128xf32>
    %45 = arith.addf %42, %44 : vector<16x128xf32>
    %cst_16 = arith.constant 0.000000e+00 : f32
    %46 = vector.broadcast %cst_16 : f32 to vector<16x128xf32>
    %47 = arith.maximumf %45, %46 : vector<16x128xf32>
    %48 = tpu.concatenate %4, %47, %4 in 0 : vector<1x128xf32>, vector<16x128xf32>, vector<1x128xf32> -> vector<18x128xf32>
    %49 = vector.extract_strided_slice %48 {offsets = [0, 0], sizes = [16, 128], strides = [1, 1]} : vector<18x128xf32> to vector<16x128xf32>
    %50 = vector.extract_strided_slice %48 {offsets = [1, 0], sizes = [16, 128], strides = [1, 1]} : vector<18x128xf32> to vector<16x128xf32>
    %51 = vector.extract_strided_slice %48 {offsets = [2, 0], sizes = [16, 128], strides = [1, 1]} : vector<18x128xf32> to vector<16x128xf32>
    %52 = tpu.concatenate %49, %50, %51 in 1 : vector<16x128xf32>, vector<16x128xf32>, vector<16x128xf32> -> vector<16x384xf32>
    %c2 = arith.constant 2 : index
    %c0_17 = arith.constant 0 : index
    %c0_18 = arith.constant 0 : index
    %53 = vector.load %arg2[%c2, %c0_17, %c0_18] : memref<12x384x128xf32, #tpu.memory_space<vmem>>, vector<1x384x128xf32>
    %54 = vector.shape_cast %53 : vector<1x384x128xf32> to vector<384x128xf32>
    %cst_19 = arith.constant dense<0.000000e+00> : vector<16x128xf32>
    %55 = tpu.matmul %52, %54, %cst_19 {dimension_numbers = #tpu.dot_dimension_numbers<[1], [0], [0], [1], [0, 0, 1, 1], [], []>} : vector<16x384xf32>, vector<384x128xf32>, vector<16x128xf32> -> vector<16x128xf32>
    %56 = vector.extract_strided_slice %2 {offsets = [3, 0], sizes = [1, 128], strides = [1, 1]} : vector<12x128xf32> to vector<1x128xf32>
    %57 = vector.broadcast %56 : vector<1x128xf32> to vector<16x128xf32>
    %58 = arith.mulf %55, %57 : vector<16x128xf32>
    %59 = vector.extract_strided_slice %3 {offsets = [3, 0], sizes = [1, 128], strides = [1, 1]} : vector<12x128xf32> to vector<1x128xf32>
    %60 = vector.broadcast %59 : vector<1x128xf32> to vector<16x128xf32>
    %61 = arith.addf %58, %60 : vector<16x128xf32>
    %cst_20 = arith.constant 0.000000e+00 : f32
    %62 = vector.broadcast %cst_20 : f32 to vector<16x128xf32>
    %63 = arith.maximumf %61, %62 : vector<16x128xf32>
    %64 = tpu.concatenate %4, %63, %4 in 0 : vector<1x128xf32>, vector<16x128xf32>, vector<1x128xf32> -> vector<18x128xf32>
    %65 = vector.extract_strided_slice %64 {offsets = [0, 0], sizes = [16, 128], strides = [1, 1]} : vector<18x128xf32> to vector<16x128xf32>
    %66 = vector.extract_strided_slice %64 {offsets = [1, 0], sizes = [16, 128], strides = [1, 1]} : vector<18x128xf32> to vector<16x128xf32>
    %67 = vector.extract_strided_slice %64 {offsets = [2, 0], sizes = [16, 128], strides = [1, 1]} : vector<18x128xf32> to vector<16x128xf32>
    %68 = tpu.concatenate %65, %66, %67 in 1 : vector<16x128xf32>, vector<16x128xf32>, vector<16x128xf32> -> vector<16x384xf32>
    %c3 = arith.constant 3 : index
    %c0_21 = arith.constant 0 : index
    %c0_22 = arith.constant 0 : index
    %69 = vector.load %arg2[%c3, %c0_21, %c0_22] : memref<12x384x128xf32, #tpu.memory_space<vmem>>, vector<1x384x128xf32>
    %70 = vector.shape_cast %69 : vector<1x384x128xf32> to vector<384x128xf32>
    %cst_23 = arith.constant dense<0.000000e+00> : vector<16x128xf32>
    %71 = tpu.matmul %68, %70, %cst_23 {dimension_numbers = #tpu.dot_dimension_numbers<[1], [0], [0], [1], [0, 0, 1, 1], [], []>} : vector<16x384xf32>, vector<384x128xf32>, vector<16x128xf32> -> vector<16x128xf32>
    %cst_24 = arith.constant 4.000000e+00 : f32
    %72 = vector.broadcast %cst_24 : f32 to vector<16x128xf32>
    %73 = arith.mulf %72, %36 : vector<16x128xf32>
    %cst_25 = arith.constant 6.000000e+00 : f32
    %74 = vector.broadcast %cst_25 : f32 to vector<16x128xf32>
    %75 = arith.mulf %74, %71 : vector<16x128xf32>
    %76 = arith.addf %73, %75 : vector<16x128xf32>
    %cst_26 = arith.constant 4.000000e-02 : f32
    %77 = vector.broadcast %cst_26 : f32 to vector<16x128xf32>
    %78 = arith.mulf %77, %76 : vector<16x128xf32>
    %79 = arith.addf %78, %1 : vector<16x128xf32>
    %80 = vector.extract_strided_slice %2 {offsets = [4, 0], sizes = [1, 128], strides = [1, 1]} : vector<12x128xf32> to vector<1x128xf32>
    %81 = vector.broadcast %80 : vector<1x128xf32> to vector<16x128xf32>
    %82 = arith.mulf %79, %81 : vector<16x128xf32>
    %83 = vector.extract_strided_slice %3 {offsets = [4, 0], sizes = [1, 128], strides = [1, 1]} : vector<12x128xf32> to vector<1x128xf32>
    %84 = vector.broadcast %83 : vector<1x128xf32> to vector<16x128xf32>
    %85 = arith.addf %82, %84 : vector<16x128xf32>
    %cst_27 = arith.constant 0.000000e+00 : f32
    %86 = vector.broadcast %cst_27 : f32 to vector<16x128xf32>
    %87 = arith.maximumf %85, %86 : vector<16x128xf32>
    %88 = tpu.concatenate %4, %87, %4 in 0 : vector<1x128xf32>, vector<16x128xf32>, vector<1x128xf32> -> vector<18x128xf32>
    %89 = vector.extract_strided_slice %88 {offsets = [0, 0], sizes = [16, 128], strides = [1, 1]} : vector<18x128xf32> to vector<16x128xf32>
    %90 = vector.extract_strided_slice %88 {offsets = [1, 0], sizes = [16, 128], strides = [1, 1]} : vector<18x128xf32> to vector<16x128xf32>
    %91 = vector.extract_strided_slice %88 {offsets = [2, 0], sizes = [16, 128], strides = [1, 1]} : vector<18x128xf32> to vector<16x128xf32>
    %92 = tpu.concatenate %89, %90, %91 in 1 : vector<16x128xf32>, vector<16x128xf32>, vector<16x128xf32> -> vector<16x384xf32>
    %c4 = arith.constant 4 : index
    %c0_28 = arith.constant 0 : index
    %c0_29 = arith.constant 0 : index
    %93 = vector.load %arg2[%c4, %c0_28, %c0_29] : memref<12x384x128xf32, #tpu.memory_space<vmem>>, vector<1x384x128xf32>
    %94 = vector.shape_cast %93 : vector<1x384x128xf32> to vector<384x128xf32>
    %cst_30 = arith.constant dense<0.000000e+00> : vector<16x128xf32>
    %95 = tpu.matmul %92, %94, %cst_30 {dimension_numbers = #tpu.dot_dimension_numbers<[1], [0], [0], [1], [0, 0, 1, 1], [], []>} : vector<16x384xf32>, vector<384x128xf32>, vector<16x128xf32> -> vector<16x128xf32>
    %96 = vector.extract_strided_slice %2 {offsets = [5, 0], sizes = [1, 128], strides = [1, 1]} : vector<12x128xf32> to vector<1x128xf32>
    %97 = vector.broadcast %96 : vector<1x128xf32> to vector<16x128xf32>
    %98 = arith.mulf %95, %97 : vector<16x128xf32>
    %99 = vector.extract_strided_slice %3 {offsets = [5, 0], sizes = [1, 128], strides = [1, 1]} : vector<12x128xf32> to vector<1x128xf32>
    %100 = vector.broadcast %99 : vector<1x128xf32> to vector<16x128xf32>
    %101 = arith.addf %98, %100 : vector<16x128xf32>
    %cst_31 = arith.constant 0.000000e+00 : f32
    %102 = vector.broadcast %cst_31 : f32 to vector<16x128xf32>
    %103 = arith.maximumf %101, %102 : vector<16x128xf32>
    %104 = tpu.concatenate %4, %103, %4 in 0 : vector<1x128xf32>, vector<16x128xf32>, vector<1x128xf32> -> vector<18x128xf32>
    %105 = vector.extract_strided_slice %104 {offsets = [0, 0], sizes = [16, 128], strides = [1, 1]} : vector<18x128xf32> to vector<16x128xf32>
    %106 = vector.extract_strided_slice %104 {offsets = [1, 0], sizes = [16, 128], strides = [1, 1]} : vector<18x128xf32> to vector<16x128xf32>
    %107 = vector.extract_strided_slice %104 {offsets = [2, 0], sizes = [16, 128], strides = [1, 1]} : vector<18x128xf32> to vector<16x128xf32>
    %108 = tpu.concatenate %105, %106, %107 in 1 : vector<16x128xf32>, vector<16x128xf32>, vector<16x128xf32> -> vector<16x384xf32>
    %c5 = arith.constant 5 : index
    %c0_32 = arith.constant 0 : index
    %c0_33 = arith.constant 0 : index
    %109 = vector.load %arg2[%c5, %c0_32, %c0_33] : memref<12x384x128xf32, #tpu.memory_space<vmem>>, vector<1x384x128xf32>
    %110 = vector.shape_cast %109 : vector<1x384x128xf32> to vector<384x128xf32>
    %cst_34 = arith.constant dense<0.000000e+00> : vector<16x128xf32>
    %111 = tpu.matmul %108, %110, %cst_34 {dimension_numbers = #tpu.dot_dimension_numbers<[1], [0], [0], [1], [0, 0, 1, 1], [], []>} : vector<16x384xf32>, vector<384x128xf32>, vector<16x128xf32> -> vector<16x128xf32>
    %cst_35 = arith.constant 1.200000e+01 : f32
    %112 = vector.broadcast %cst_35 : f32 to vector<16x128xf32>
    %113 = arith.mulf %112, %71 : vector<16x128xf32>
    %114 = arith.subf %36, %113 : vector<16x128xf32>
    %cst_36 = arith.constant 1.500000e+01 : f32
    %115 = vector.broadcast %cst_36 : f32 to vector<16x128xf32>
    %116 = arith.mulf %115, %111 : vector<16x128xf32>
    %117 = arith.addf %114, %116 : vector<16x128xf32>
    %cst_37 = arith.constant 2.500000e-01 : f32
    %118 = vector.broadcast %cst_37 : f32 to vector<16x128xf32>
    %119 = arith.mulf %118, %117 : vector<16x128xf32>
    %120 = arith.addf %119, %1 : vector<16x128xf32>
    %121 = vector.extract_strided_slice %2 {offsets = [6, 0], sizes = [1, 128], strides = [1, 1]} : vector<12x128xf32> to vector<1x128xf32>
    %122 = vector.broadcast %121 : vector<1x128xf32> to vector<16x128xf32>
    %123 = arith.mulf %120, %122 : vector<16x128xf32>
    %124 = vector.extract_strided_slice %3 {offsets = [6, 0], sizes = [1, 128], strides = [1, 1]} : vector<12x128xf32> to vector<1x128xf32>
    %125 = vector.broadcast %124 : vector<1x128xf32> to vector<16x128xf32>
    %126 = arith.addf %123, %125 : vector<16x128xf32>
    %cst_38 = arith.constant 0.000000e+00 : f32
    %127 = vector.broadcast %cst_38 : f32 to vector<16x128xf32>
    %128 = arith.maximumf %126, %127 : vector<16x128xf32>
    %129 = tpu.concatenate %4, %128, %4 in 0 : vector<1x128xf32>, vector<16x128xf32>, vector<1x128xf32> -> vector<18x128xf32>
    %130 = vector.extract_strided_slice %129 {offsets = [0, 0], sizes = [16, 128], strides = [1, 1]} : vector<18x128xf32> to vector<16x128xf32>
    %131 = vector.extract_strided_slice %129 {offsets = [1, 0], sizes = [16, 128], strides = [1, 1]} : vector<18x128xf32> to vector<16x128xf32>
    %132 = vector.extract_strided_slice %129 {offsets = [2, 0], sizes = [16, 128], strides = [1, 1]} : vector<18x128xf32> to vector<16x128xf32>
    %133 = tpu.concatenate %130, %131, %132 in 1 : vector<16x128xf32>, vector<16x128xf32>, vector<16x128xf32> -> vector<16x384xf32>
    %c6 = arith.constant 6 : index
    %c0_39 = arith.constant 0 : index
    %c0_40 = arith.constant 0 : index
    %134 = vector.load %arg2[%c6, %c0_39, %c0_40] : memref<12x384x128xf32, #tpu.memory_space<vmem>>, vector<1x384x128xf32>
    %135 = vector.shape_cast %134 : vector<1x384x128xf32> to vector<384x128xf32>
    %cst_41 = arith.constant dense<0.000000e+00> : vector<16x128xf32>
    %136 = tpu.matmul %133, %135, %cst_41 {dimension_numbers = #tpu.dot_dimension_numbers<[1], [0], [0], [1], [0, 0, 1, 1], [], []>} : vector<16x384xf32>, vector<384x128xf32>, vector<16x128xf32> -> vector<16x128xf32>
    %137 = vector.extract_strided_slice %2 {offsets = [7, 0], sizes = [1, 128], strides = [1, 1]} : vector<12x128xf32> to vector<1x128xf32>
    %138 = vector.broadcast %137 : vector<1x128xf32> to vector<16x128xf32>
    %139 = arith.mulf %136, %138 : vector<16x128xf32>
    %140 = vector.extract_strided_slice %3 {offsets = [7, 0], sizes = [1, 128], strides = [1, 1]} : vector<12x128xf32> to vector<1x128xf32>
    %141 = vector.broadcast %140 : vector<1x128xf32> to vector<16x128xf32>
    %142 = arith.addf %139, %141 : vector<16x128xf32>
    %cst_42 = arith.constant 0.000000e+00 : f32
    %143 = vector.broadcast %cst_42 : f32 to vector<16x128xf32>
    %144 = arith.maximumf %142, %143 : vector<16x128xf32>
    %145 = tpu.concatenate %4, %144, %4 in 0 : vector<1x128xf32>, vector<16x128xf32>, vector<1x128xf32> -> vector<18x128xf32>
    %146 = vector.extract_strided_slice %145 {offsets = [0, 0], sizes = [16, 128], strides = [1, 1]} : vector<18x128xf32> to vector<16x128xf32>
    %147 = vector.extract_strided_slice %145 {offsets = [1, 0], sizes = [16, 128], strides = [1, 1]} : vector<18x128xf32> to vector<16x128xf32>
    %148 = vector.extract_strided_slice %145 {offsets = [2, 0], sizes = [16, 128], strides = [1, 1]} : vector<18x128xf32> to vector<16x128xf32>
    %149 = tpu.concatenate %146, %147, %148 in 1 : vector<16x128xf32>, vector<16x128xf32>, vector<16x128xf32> -> vector<16x384xf32>
    %c7 = arith.constant 7 : index
    %c0_43 = arith.constant 0 : index
    %c0_44 = arith.constant 0 : index
    %150 = vector.load %arg2[%c7, %c0_43, %c0_44] : memref<12x384x128xf32, #tpu.memory_space<vmem>>, vector<1x384x128xf32>
    %151 = vector.shape_cast %150 : vector<1x384x128xf32> to vector<384x128xf32>
    %cst_45 = arith.constant dense<0.000000e+00> : vector<16x128xf32>
    %152 = tpu.matmul %149, %151, %cst_45 {dimension_numbers = #tpu.dot_dimension_numbers<[1], [0], [0], [1], [0, 0, 1, 1], [], []>} : vector<16x384xf32>, vector<384x128xf32>, vector<16x128xf32> -> vector<16x128xf32>
    %cst_46 = arith.constant 6.000000e+00 : f32
    %153 = vector.broadcast %cst_46 : f32 to vector<16x128xf32>
    %154 = arith.mulf %153, %36 : vector<16x128xf32>
    %cst_47 = arith.constant 9.000000e+01 : f32
    %155 = vector.broadcast %cst_47 : f32 to vector<16x128xf32>
    %156 = arith.mulf %155, %71 : vector<16x128xf32>
    %157 = arith.addf %154, %156 : vector<16x128xf32>
    %cst_48 = arith.constant 5.000000e+01 : f32
    %158 = vector.broadcast %cst_48 : f32 to vector<16x128xf32>
    %159 = arith.mulf %158, %111 : vector<16x128xf32>
    %160 = arith.subf %157, %159 : vector<16x128xf32>
    %cst_49 = arith.constant 8.000000e+00 : f32
    %161 = vector.broadcast %cst_49 : f32 to vector<16x128xf32>
    %162 = arith.mulf %161, %152 : vector<16x128xf32>
    %163 = arith.addf %160, %162 : vector<16x128xf32>
    %cst_50 = arith.constant 0.0123456791 : f32
    %164 = vector.broadcast %cst_50 : f32 to vector<16x128xf32>
    %165 = arith.mulf %164, %163 : vector<16x128xf32>
    %166 = arith.addf %165, %1 : vector<16x128xf32>
    %167 = vector.extract_strided_slice %2 {offsets = [8, 0], sizes = [1, 128], strides = [1, 1]} : vector<12x128xf32> to vector<1x128xf32>
    %168 = vector.broadcast %167 : vector<1x128xf32> to vector<16x128xf32>
    %169 = arith.mulf %166, %168 : vector<16x128xf32>
    %170 = vector.extract_strided_slice %3 {offsets = [8, 0], sizes = [1, 128], strides = [1, 1]} : vector<12x128xf32> to vector<1x128xf32>
    %171 = vector.broadcast %170 : vector<1x128xf32> to vector<16x128xf32>
    %172 = arith.addf %169, %171 : vector<16x128xf32>
    %cst_51 = arith.constant 0.000000e+00 : f32
    %173 = vector.broadcast %cst_51 : f32 to vector<16x128xf32>
    %174 = arith.maximumf %172, %173 : vector<16x128xf32>
    %175 = tpu.concatenate %4, %174, %4 in 0 : vector<1x128xf32>, vector<16x128xf32>, vector<1x128xf32> -> vector<18x128xf32>
    %176 = vector.extract_strided_slice %175 {offsets = [0, 0], sizes = [16, 128], strides = [1, 1]} : vector<18x128xf32> to vector<16x128xf32>
    %177 = vector.extract_strided_slice %175 {offsets = [1, 0], sizes = [16, 128], strides = [1, 1]} : vector<18x128xf32> to vector<16x128xf32>
    %178 = vector.extract_strided_slice %175 {offsets = [2, 0], sizes = [16, 128], strides = [1, 1]} : vector<18x128xf32> to vector<16x128xf32>
    %179 = tpu.concatenate %176, %177, %178 in 1 : vector<16x128xf32>, vector<16x128xf32>, vector<16x128xf32> -> vector<16x384xf32>
    %c8 = arith.constant 8 : index
    %c0_52 = arith.constant 0 : index
    %c0_53 = arith.constant 0 : index
    %180 = vector.load %arg2[%c8, %c0_52, %c0_53] : memref<12x384x128xf32, #tpu.memory_space<vmem>>, vector<1x384x128xf32>
    %181 = vector.shape_cast %180 : vector<1x384x128xf32> to vector<384x128xf32>
    %cst_54 = arith.constant dense<0.000000e+00> : vector<16x128xf32>
    %182 = tpu.matmul %179, %181, %cst_54 {dimension_numbers = #tpu.dot_dimension_numbers<[1], [0], [0], [1], [0, 0, 1, 1], [], []>} : vector<16x384xf32>, vector<384x128xf32>, vector<16x128xf32> -> vector<16x128xf32>
    %183 = vector.extract_strided_slice %2 {offsets = [9, 0], sizes = [1, 128], strides = [1, 1]} : vector<12x128xf32> to vector<1x128xf32>
    %184 = vector.broadcast %183 : vector<1x128xf32> to vector<16x128xf32>
    %185 = arith.mulf %182, %184 : vector<16x128xf32>
    %186 = vector.extract_strided_slice %3 {offsets = [9, 0], sizes = [1, 128], strides = [1, 1]} : vector<12x128xf32> to vector<1x128xf32>
    %187 = vector.broadcast %186 : vector<1x128xf32> to vector<16x128xf32>
    %188 = arith.addf %185, %187 : vector<16x128xf32>
    %cst_55 = arith.constant 0.000000e+00 : f32
    %189 = vector.broadcast %cst_55 : f32 to vector<16x128xf32>
    %190 = arith.maximumf %188, %189 : vector<16x128xf32>
    %191 = tpu.concatenate %4, %190, %4 in 0 : vector<1x128xf32>, vector<16x128xf32>, vector<1x128xf32> -> vector<18x128xf32>
    %192 = vector.extract_strided_slice %191 {offsets = [0, 0], sizes = [16, 128], strides = [1, 1]} : vector<18x128xf32> to vector<16x128xf32>
    %193 = vector.extract_strided_slice %191 {offsets = [1, 0], sizes = [16, 128], strides = [1, 1]} : vector<18x128xf32> to vector<16x128xf32>
    %194 = vector.extract_strided_slice %191 {offsets = [2, 0], sizes = [16, 128], strides = [1, 1]} : vector<18x128xf32> to vector<16x128xf32>
    %195 = tpu.concatenate %192, %193, %194 in 1 : vector<16x128xf32>, vector<16x128xf32>, vector<16x128xf32> -> vector<16x384xf32>
    %c9 = arith.constant 9 : index
    %c0_56 = arith.constant 0 : index
    %c0_57 = arith.constant 0 : index
    %196 = vector.load %arg2[%c9, %c0_56, %c0_57] : memref<12x384x128xf32, #tpu.memory_space<vmem>>, vector<1x384x128xf32>
    %197 = vector.shape_cast %196 : vector<1x384x128xf32> to vector<384x128xf32>
    %cst_58 = arith.constant dense<0.000000e+00> : vector<16x128xf32>
    %198 = tpu.matmul %195, %197, %cst_58 {dimension_numbers = #tpu.dot_dimension_numbers<[1], [0], [0], [1], [0, 0, 1, 1], [], []>} : vector<16x384xf32>, vector<384x128xf32>, vector<16x128xf32> -> vector<16x128xf32>
    %cst_59 = arith.constant 6.000000e+00 : f32
    %199 = vector.broadcast %cst_59 : f32 to vector<16x128xf32>
    %200 = arith.mulf %199, %36 : vector<16x128xf32>
    %cst_60 = arith.constant 3.600000e+01 : f32
    %201 = vector.broadcast %cst_60 : f32 to vector<16x128xf32>
    %202 = arith.mulf %201, %71 : vector<16x128xf32>
    %203 = arith.addf %200, %202 : vector<16x128xf32>
    %cst_61 = arith.constant 1.000000e+01 : f32
    %204 = vector.broadcast %cst_61 : f32 to vector<16x128xf32>
    %205 = arith.mulf %204, %111 : vector<16x128xf32>
    %206 = arith.addf %203, %205 : vector<16x128xf32>
    %cst_62 = arith.constant 8.000000e+00 : f32
    %207 = vector.broadcast %cst_62 : f32 to vector<16x128xf32>
    %208 = arith.mulf %207, %152 : vector<16x128xf32>
    %209 = arith.addf %206, %208 : vector<16x128xf32>
    %cst_63 = arith.constant 0.0133333337 : f32
    %210 = vector.broadcast %cst_63 : f32 to vector<16x128xf32>
    %211 = arith.mulf %210, %209 : vector<16x128xf32>
    %212 = arith.addf %211, %1 : vector<16x128xf32>
    %213 = vector.extract_strided_slice %2 {offsets = [10, 0], sizes = [1, 128], strides = [1, 1]} : vector<12x128xf32> to vector<1x128xf32>
    %214 = vector.broadcast %213 : vector<1x128xf32> to vector<16x128xf32>
    %215 = arith.mulf %212, %214 : vector<16x128xf32>
    %216 = vector.extract_strided_slice %3 {offsets = [10, 0], sizes = [1, 128], strides = [1, 1]} : vector<12x128xf32> to vector<1x128xf32>
    %217 = vector.broadcast %216 : vector<1x128xf32> to vector<16x128xf32>
    %218 = arith.addf %215, %217 : vector<16x128xf32>
    %cst_64 = arith.constant 0.000000e+00 : f32
    %219 = vector.broadcast %cst_64 : f32 to vector<16x128xf32>
    %220 = arith.maximumf %218, %219 : vector<16x128xf32>
    %221 = tpu.concatenate %4, %220, %4 in 0 : vector<1x128xf32>, vector<16x128xf32>, vector<1x128xf32> -> vector<18x128xf32>
    %222 = vector.extract_strided_slice %221 {offsets = [0, 0], sizes = [16, 128], strides = [1, 1]} : vector<18x128xf32> to vector<16x128xf32>
    %223 = vector.extract_strided_slice %221 {offsets = [1, 0], sizes = [16, 128], strides = [1, 1]} : vector<18x128xf32> to vector<16x128xf32>
    %224 = vector.extract_strided_slice %221 {offsets = [2, 0], sizes = [16, 128], strides = [1, 1]} : vector<18x128xf32> to vector<16x128xf32>
    %225 = tpu.concatenate %222, %223, %224 in 1 : vector<16x128xf32>, vector<16x128xf32>, vector<16x128xf32> -> vector<16x384xf32>
    %c10 = arith.constant 10 : index
    %c0_65 = arith.constant 0 : index
    %c0_66 = arith.constant 0 : index
    %226 = vector.load %arg2[%c10, %c0_65, %c0_66] : memref<12x384x128xf32, #tpu.memory_space<vmem>>, vector<1x384x128xf32>
    %227 = vector.shape_cast %226 : vector<1x384x128xf32> to vector<384x128xf32>
    %cst_67 = arith.constant dense<0.000000e+00> : vector<16x128xf32>
    %228 = tpu.matmul %225, %227, %cst_67 {dimension_numbers = #tpu.dot_dimension_numbers<[1], [0], [0], [1], [0, 0, 1, 1], [], []>} : vector<16x384xf32>, vector<384x128xf32>, vector<16x128xf32> -> vector<16x128xf32>
    %229 = vector.extract_strided_slice %2 {offsets = [11, 0], sizes = [1, 128], strides = [1, 1]} : vector<12x128xf32> to vector<1x128xf32>
    %230 = vector.broadcast %229 : vector<1x128xf32> to vector<16x128xf32>
    %231 = arith.mulf %228, %230 : vector<16x128xf32>
    %232 = vector.extract_strided_slice %3 {offsets = [11, 0], sizes = [1, 128], strides = [1, 1]} : vector<12x128xf32> to vector<1x128xf32>
    %233 = vector.broadcast %232 : vector<1x128xf32> to vector<16x128xf32>
    %234 = arith.addf %231, %233 : vector<16x128xf32>
    %cst_68 = arith.constant 0.000000e+00 : f32
    %235 = vector.broadcast %cst_68 : f32 to vector<16x128xf32>
    %236 = arith.maximumf %234, %235 : vector<16x128xf32>
    %237 = tpu.concatenate %4, %236, %4 in 0 : vector<1x128xf32>, vector<16x128xf32>, vector<1x128xf32> -> vector<18x128xf32>
    %238 = vector.extract_strided_slice %237 {offsets = [0, 0], sizes = [16, 128], strides = [1, 1]} : vector<18x128xf32> to vector<16x128xf32>
    %239 = vector.extract_strided_slice %237 {offsets = [1, 0], sizes = [16, 128], strides = [1, 1]} : vector<18x128xf32> to vector<16x128xf32>
    %240 = vector.extract_strided_slice %237 {offsets = [2, 0], sizes = [16, 128], strides = [1, 1]} : vector<18x128xf32> to vector<16x128xf32>
    %241 = tpu.concatenate %238, %239, %240 in 1 : vector<16x128xf32>, vector<16x128xf32>, vector<16x128xf32> -> vector<16x384xf32>
    %c11 = arith.constant 11 : index
    %c0_69 = arith.constant 0 : index
    %c0_70 = arith.constant 0 : index
    %242 = vector.load %arg2[%c11, %c0_69, %c0_70] : memref<12x384x128xf32, #tpu.memory_space<vmem>>, vector<1x384x128xf32>
    %243 = vector.shape_cast %242 : vector<1x384x128xf32> to vector<384x128xf32>
    %cst_71 = arith.constant dense<0.000000e+00> : vector<16x128xf32>
    %244 = tpu.matmul %241, %243, %cst_71 {dimension_numbers = #tpu.dot_dimension_numbers<[1], [0], [0], [1], [0, 0, 1, 1], [], []>} : vector<16x384xf32>, vector<384x128xf32>, vector<16x128xf32> -> vector<16x128xf32>
    %cst_72 = arith.constant 2.300000e+01 : f32
    %245 = vector.broadcast %cst_72 : f32 to vector<16x128xf32>
    %246 = arith.mulf %245, %36 : vector<16x128xf32>
    %cst_73 = arith.constant 1.250000e+02 : f32
    %247 = vector.broadcast %cst_73 : f32 to vector<16x128xf32>
    %248 = arith.mulf %247, %71 : vector<16x128xf32>
    %249 = arith.addf %246, %248 : vector<16x128xf32>
    %cst_74 = arith.constant 8.100000e+01 : f32
    %250 = vector.broadcast %cst_74 : f32 to vector<16x128xf32>
    %251 = arith.mulf %250, %198 : vector<16x128xf32>
    %252 = arith.subf %249, %251 : vector<16x128xf32>
    %cst_75 = arith.constant 1.250000e+02 : f32
    %253 = vector.broadcast %cst_75 : f32 to vector<16x128xf32>
    %254 = arith.mulf %253, %244 : vector<16x128xf32>
    %255 = arith.addf %252, %254 : vector<16x128xf32>
    %cst_76 = arith.constant 0.00520833349 : f32
    %256 = vector.broadcast %cst_76 : f32 to vector<16x128xf32>
    %257 = arith.mulf %256, %255 : vector<16x128xf32>
    %258 = arith.addf %257, %1 : vector<16x128xf32>
    %cst_77 = arith.constant 0.000000e+00 : f32
    %259 = vector.broadcast %cst_77 : f32 to vector<16x128xf32>
    %260 = arith.maximumf %258, %259 : vector<16x128xf32>
    %261 = vector.shape_cast %260 : vector<16x128xf32> to vector<1x16x128xf32>
    %c0_78 = arith.constant 0 : index
    %c0_79 = arith.constant 0 : index
    %c0_80 = arith.constant 0 : index
    %262 = vector.load %arg5[%c0_78, %c0_79, %c0_80] : memref<1x16x128xf32, #tpu.memory_space<vmem>>, vector<1x16x128xf32>
    tpu.vector_store %arg5[%c0_78, %c0_79, %c0_80], %261 {strides = array<i32>} : memref<1x16x128xf32, #tpu.memory_space<vmem>>, vector<1x16x128xf32>,
    return
  }
  func.func @transform_0(%arg0: i32) -> (i32, i32, i32) {
    %c0_i32 = arith.constant 0 : i32
    %c0_i32_0 = arith.constant 0 : i32
    %c0_i32_1 = arith.constant 0 : i32
    return %arg0, %c0_i32, %c0_i32_0 : i32, i32, i32
  }
  func.func @transform_1(%arg0: i32) -> (i32, i32, i32) {
    %c0_i32 = arith.constant 0 : i32
    %c0_i32_0 = arith.constant 0 : i32
    %c0_i32_1 = arith.constant 0 : i32
    %c0_i32_2 = arith.constant 0 : i32
    return %c0_i32, %c0_i32_0, %c0_i32_1 : i32, i32, i32
  }
  func.func @transform_2(%arg0: i32) -> (i32, i32) {
    %c0_i32 = arith.constant 0 : i32
    %c0_i32_0 = arith.constant 0 : i32
    %c0_i32_1 = arith.constant 0 : i32
    return %c0_i32, %c0_i32_0 : i32, i32
  }
  func.func @transform_3(%arg0: i32) -> (i32, i32) {
    %c0_i32 = arith.constant 0 : i32
    %c0_i32_0 = arith.constant 0 : i32
    %c0_i32_1 = arith.constant 0 : i32
    return %c0_i32, %c0_i32_0 : i32, i32
  }
  func.func @transform_4(%arg0: i32) -> (i32, i32, i32) {
    %c0_i32 = arith.constant 0 : i32
    %c0_i32_0 = arith.constant 0 : i32
    %c0_i32_1 = arith.constant 0 : i32
    return %arg0, %c0_i32, %c0_i32_0 : i32, i32, i32
  }
}

</mosaic_0001>

<llo_original>
// kernel: tile.123
$region0: #{tile.123}
  #allocation0 [shape = 's32[1]{0}', space=sflag, size = 0x4, scoped, tag = 'scoped memory for tile.123']
  %s0 = inlined_call_operand.vmem [shape: f32[8], index: 0, kind: input, shape index: {}]
  %s1 = inlined_call_operand.vmem [shape: f32[16,8], index: 1, kind: output, shape index: {}]
  // Predicated region
  $region2: #{tile.123} parent=0 // pred_check
    _
  $region3: #{tile.123} parent=0 // pred_check_branch
    %3 = sbr.rel (0) target = $region5
  $region4: #{tile.123} parent=0 // pred_region
    _
  $region5: #{tile.123} parent=0 // pred_fallthru
    _
  %v4 = vld [vmem:[%s0] ss:$0 sm:$0xff]
  %5 = vst [vmem:[%s1] sm:$0xff] %v4
  %s6 = scalar_lea.vmem %s1, 8
  %7 = vst [vmem:[%s6] sm:$0xff] %v4

// kernel: tile.168
$region0: #{tile.168}
  %s0 = inlined_call_operand.vmem [shape: f32[16,8], index: 0, kind: input, shape index: {}]
  %s1 = inlined_call_operand.vmem [shape: f32[1,128], index: 1, kind: output, shape index: {}]
  $region1: #{tile.168} parent=0
    #allocation0 [shape = 'u8[4096]{0}', space=vmem, size = 0x1000, scoped, tag = 'scoped mem for output reshape']
    %v2 = vld [vmem:[%s0] sm:$0x1]
    %vm3 = vcmask 64512
    %4 = vst.msk [vmem:[#allocation0] sm:$0x1] %vm3, %v2
    %s5 = scalar_lea.vmem %s0, 15
    %v6 = vld [vmem:[%s5] sm:$0x1]
    %7 = vrot.lane.b32.xlu0 %v6, 120
    %v8 = vpop.permute.xlu0 %7
    %vm9 = vcmask 1048512
    %10 = vst.msk [vmem:[#allocation0] sm:$0x1] %vm9, %v8
    %s11 = scalar_lea.vmem %s0, 14
    %v12 = vld [vmem:[%s11] sm:$0x1]
    %13 = vrot.lane.b32.xlu0 %v12, 112
    %v14 = vpop.permute.xlu0 %13
    %vm15 = vcmask 982912
    %16 = vst.msk [vmem:[#allocation0] sm:$0x1] %vm15, %v14
    %s17 = scalar_lea.vmem %s0, 13
    %v18 = vld [vmem:[%s17] sm:$0x1]
    %19 = vrot.lane.b32.xlu0 %v18, 104
    %v20 = vpop.permute.xlu0 %19
    %vm21 = vcmask 917312
    %22 = vst.msk [vmem:[#allocation0] sm:$0x1] %vm21, %v20
    %s23 = scalar_lea.vmem %s0, 12
    %v24 = vld [vmem:[%s23] sm:$0x1]
    %25 = vrot.lane.b32.xlu0 %v24, 96
    %v26 = vpop.permute.xlu0 %25
    %vm27 = vcmask 851712
    %28 = vst.msk [vmem:[#allocation0] sm:$0x1] %vm27, %v26
    %s29 = scalar_lea.vmem %s0, 11
    %v30 = vld [vmem:[%s29] sm:$0x1]
    %31 = vrot.lane.b32.xlu0 %v30, 88
    %v32 = vpop.permute.xlu0 %31
    %vm33 = vcmask 786112
    %34 = vst.msk [vmem:[#allocation0] sm:$0x1] %vm33, %v32
    %s35 = scalar_lea.vmem %s0, 10
    %v36 = vld [vmem:[%s35] sm:$0x1]
    %37 = vrot.lane.b32.xlu0 %v36, 80
    %v38 = vpop.permute.xlu0 %37
    %vm39 = vcmask 720512
    %40 = vst.msk [vmem:[#allocation0] sm:$0x1] %vm39, %v38
    %s41 = scalar_lea.vmem %s0, 9
    %v42 = vld [vmem:[%s41] sm:$0x1]
    %43 = vrot.lane.b32.xlu0 %v42, 72
    %v44 = vpop.permute.xlu0 %43
    %vm45 = vcmask 654912
    %46 = vst.msk [vmem:[#allocation0] sm:$0x1] %vm45, %v44
    %s47 = scalar_lea.vmem %s0, 8
    %v48 = vld [vmem:[%s47] sm:$0x1]
    %49 = vrot.lane.b32.xlu0 %v48, 64
    %v50 = vpop.permute.xlu0 %49
    %vm51 = vcmask 589312
    %52 = vst.msk [vmem:[#allocation0] sm:$0x1] %vm51, %v50
    %s53 = scalar_lea.vmem %s0, 7
    %v54 = vld [vmem:[%s53] sm:$0x1]
    %55 = vrot.lane.b32.xlu0 %v54, 56
    %v56 = vpop.permute.xlu0 %55
    %vm57 = vcmask 523712
    %58 = vst.msk [vmem:[#allocation0] sm:$0x1] %vm57, %v56
    %s59 = scalar_lea.vmem %s0, 6
    %v60 = vld [vmem:[%s59] sm:$0x1]
    %61 = vrot.lane.b32.xlu0 %v60, 48
    %v62 = vpop.permute.xlu0 %61
    %vm63 = vcmask 458112
    %64 = vst.msk [vmem:[#allocation0] sm:$0x1] %vm63, %v62
    %s65 = scalar_lea.vmem %s0, 5
    %v66 = vld [vmem:[%s65] sm:$0x1]
    %67 = vrot.lane.b32.xlu0 %v66, 40
    %v68 = vpop.permute.xlu0 %67
    %vm69 = vcmask 392512
    %70 = vst.msk [vmem:[#allocation0] sm:$0x1] %vm69, %v68
    %s71 = scalar_lea.vmem %s0, 4
    %v72 = vld [vmem:[%s71] sm:$0x1]
    %73 = vrot.lane.b32.xlu0 %v72, 32
    %v74 = vpop.permute.xlu0 %73
    %vm75 = vcmask 326912
    %76 = vst.msk [vmem:[#allocation0] sm:$0x1] %vm75, %v74
    %s77 = scalar_lea.vmem %s0, 3
    %v78 = vld [vmem:[%s77] sm:$0x1]
    %79 = vrot.lane.b32.xlu0 %v78, 24
    %v80 = vpop.permute.xlu0 %79
    %vm81 = vcmask 261312
    %82 = vst.msk [vmem:[#allocation0] sm:$0x1] %vm81, %v80
    %s83 = scalar_lea.vmem %s0, 2
    %v84 = vld [vmem:[%s83] sm:$0x1]
    %85 = vrot.lane.b32.xlu0 %v84, 16
    %v86 = vpop.permute.xlu0 %85
    %vm87 = vcmask 195712
    %88 = vst.msk [vmem:[#allocation0] sm:$0x1] %vm87, %v86
    %s89 = scalar_lea.vmem %s0, 1
    %v90 = vld [vmem:[%s89] sm:$0x1]
    %91 = vrot.lane.b32.xlu0 %v90, 8
    %v92 = vpop.permute.xlu0 %91
    %vm93 = vcmask 130112
    %94 = vst.msk [vmem:[#allocation0] sm:$0x1] %vm93, %v92
    %s96 = ssub.s32 2, 1
    %v97 = vld [vmem:[#allocation0] sm:%s96]
    %s99 = ssub.s32 2, 1
    %100 = vst [vmem:[%s1] sm:%s99] %v97

// kernel: kutta_nys56_forward.1
$region0: #{kutta_nys56_forward.1}
  #allocation0 [shape = 'u32[]', space=smem, size = 0x4, offset = 0x4, fixed_abs, tag = 'smem constant byte address 0x4 - core index']
  #allocation1 [shape = 'u32[72,128]{1,0:T(1,128)}', space=vmem, size = 0x9000, scoped, tag = 'internal scratch']
  %s0 = inlined_call_operand.vmem [shape: f32[2,16,128], index: 0, kind: input, shape index: {}]
  %s1 = inlined_call_operand.vmem [shape: f32[12,384,128], index: 1, kind: input, shape index: {}]
  %s2 = inlined_call_operand.vmem [shape: f32[12,128], index: 2, kind: input, shape index: {}]
  %s3 = inlined_call_operand.vmem [shape: f32[12,128], index: 3, kind: input, shape index: {}]
  %s4 = inlined_call_operand.vmem [shape: f32[2,16,128], index: 4, kind: output, shape index: {}]
  %s5 = sld [smem:[#allocation0]]
  $region49: #{kutta_nys56_forward.1} parent=0
    _
  %s7 = ssub.s32 1, %s5
  %s8 = scalar_select 0, %s7, %s5
  loop: start=0, step=1, limit=4
  $region2: #{kutta_nys56_forward.1} parent=0 // loop_pre_header
    _
  $region3: #{kutta_nys56_forward.1} parent=0 // loop_header
    %s10 = sphi 0, %s14
    %p11 = scmp.ge.s32.totalorder %s10, 4
    %s20 = sphi 0, %s22
    %s23 = sphi 0, %s20
    %s24 = sphi 0, %s23
    %s40 = sphi 0, %s24
    %s44 = sphi 0, %s44
    %s46 = sphi 0, %s44
    %s47 = sphi 0, %s46
    %s61 = sphi 0, %s47
    %s65 = sphi 0, %s65
    %s67 = sphi 0, %s65
    %s68 = sphi 0, %s67
    %s82 = sphi 0, %s68
    %s86 = sphi 0, %s86
    %s88 = sphi 0, %s86
    %s89 = sphi 0, %s88
    %s103 = sphi 0, %s89
    %s109 = sphi 0, %s111
    %s112 = sphi 0, %s109
    %s113 = sphi 0, %s112
    %s129 = sphi 0, %s113
  $region4: #{kutta_nys56_forward.1} parent=0 // loop_header_branch
    %13 = sbr.rel (%p11) target = $region8
  $region5: #{kutta_nys56_forward.1} parent=0 // loop_body
    %s15 = ssub.s32 %s10, 1
    %s16 = ssub.s32 %s10, 2
    %s17 = sadd.s32 %s10, 1
    %s18 = ssub.s32 %s10, %s17
    %p19 = scmp.eq.s32.totalorder %s18, 0
    %s21 = sadd.s32 %s20, 1
    %s22 = scalar_select %p19, %s20, %s21
    %p25 = pneg %p19
    %p26 = scmp.eq.s32.totalorder %s10, 1
    %p27 = por %p25, %p26
    %p28 = scmp.ne.s32.totalorder %s20, %s23
    %p29 = scmp.eq.s32.totalorder %s10, 0
    %p30 = por %p28, %p29
    %p31 = scmp.ne.s32.totalorder %s20, %s23
    %p32 = scmp.eq.s32.totalorder %s15, 1
    %p33 = por %p31, %p32
    %p34 = scmp.ne.s32.totalorder %s23, %s24
    %p35 = scmp.eq.s32.totalorder %s15, 0
    %p36 = por %p34, %p35
    %p37 = scmp.ne.s32.totalorder %s23, %s24
    %p38 = scmp.eq.s32.totalorder %s16, 1
    %p39 = por %p37, %p38
    %p41 = scmp.ne.s32.totalorder %s24, %s40
    %p42 = scmp.eq.s32.totalorder %s16, 0
    %p43 = por %p41, %p42
    %s45 = sadd.s32 %s44, 1
    %p48 = scmp.eq.s32.totalorder %s10, 1
    %p49 = scmp.ne.s32.totalorder %s44, %s46
    %p50 = scmp.eq.s32.totalorder %s10, 0
    %p51 = por %p49, %p50
    %p52 = scmp.ne.s32.totalorder %s44, %s46
    %p53 = scmp.eq.s32.totalorder %s15, 1
    %p54 = por %p52, %p53
    %p55 = scmp.ne.s32.totalorder %s46, %s47
    %p56 = scmp.eq.s32.totalorder %s15, 0
    %p57 = por %p55, %p56
    %p58 = scmp.ne.s32.totalorder %s46, %s47
    %p59 = scmp.eq.s32.totalorder %s16, 1
    %p60 = por %p58, %p59
    %p62 = scmp.ne.s32.totalorder %s47, %s61
    %p63 = scmp.eq.s32.totalorder %s16, 0
    %p64 = por %p62, %p63
    %s66 = sadd.s32 %s65, 1
    %p69 = scmp.eq.s32.totalorder %s10, 1
    %p70 = scmp.ne.s32.totalorder %s65, %s67
    %p71 = scmp.eq.s32.totalorder %s10, 0
    %p72 = por %p70, %p71
    %p73 = scmp.ne.s32.totalorder %s65, %s67
    %p74 = scmp.eq.s32.totalorder %s15, 1
    %p75 = por %p73, %p74
    %p76 = scmp.ne.s32.totalorder %s67, %s68
    %p77 = scmp.eq.s32.totalorder %s15, 0
    %p78 = por %p76, %p77
    %p79 = scmp.ne.s32.totalorder %s67, %s68
    %p80 = scmp.eq.s32.totalorder %s16, 1
    %p81 = por %p79, %p80
    %p83 = scmp.ne.s32.totalorder %s68, %s82
    %p84 = scmp.eq.s32.totalorder %s16, 0
    %p85 = por %p83, %p84
    %s87 = sadd.s32 %s86, 1
    %p90 = scmp.eq.s32.totalorder %s10, 1
    %p91 = scmp.ne.s32.totalorder %s86, %s88
    %p92 = scmp.eq.s32.totalorder %s10, 0
    %p93 = por %p91, %p92
    %p94 = scmp.ne.s32.totalorder %s86, %s88
    %p95 = scmp.eq.s32.totalorder %s15, 1
    %p96 = por %p94, %p95
    %p97 = scmp.ne.s32.totalorder %s88, %s89
    %p98 = scmp.eq.s32.totalorder %s15, 0
    %p99 = por %p97, %p98
    %p100 = scmp.ne.s32.totalorder %s88, %s89
    %p101 = scmp.eq.s32.totalorder %s16, 1
    %p102 = por %p100, %p101
    %p104 = scmp.ne.s32.totalorder %s89, %s103
    %p105 = scmp.eq.s32.totalorder %s16, 0
    %p106 = por %p104, %p105
    %s107 = ssub.s32 %s10, %s17
    %p108 = scmp.eq.s32.totalorder %s107, 0
    %s110 = sadd.s32 %s109, 1
    %s111 = scalar_select %p108, %s109, %s110
    %p114 = pneg %p108
    %p115 = scmp.eq.s32.totalorder %s10, 1
    %p116 = por %p114, %p115
    %p117 = scmp.ne.s32.totalorder %s109, %s112
    %p118 = scmp.eq.s32.totalorder %s10, 0
    %p119 = por %p117, %p118
    %p120 = scmp.ne.s32.totalorder %s109, %s112
    %p121 = scmp.eq.s32.totalorder %s15, 1
    %p122 = por %p120, %p121
    %p123 = scmp.ne.s32.totalorder %s112, %s113
    %p124 = scmp.eq.s32.totalorder %s15, 0
    %p125 = por %p123, %p124
    %p126 = scmp.ne.s32.totalorder %s112, %s113
    %p127 = scmp.eq.s32.totalorder %s16, 1
    %p128 = por %p126, %p127
    %p130 = scmp.ne.s32.totalorder %s113, %s129
    %p131 = scmp.eq.s32.totalorder %s16, 0
    %p132 = por %p130, %p131
    %p133 = scmp.le.s32.totalorder 1, %s10
    %p134 = scmp.lt.s32.totalorder %s10, 3
    %p135 = pnand %p133, %p134
    %p136 = pneg %p135
    // Predicated region
    $region9: #{kutta_nys56_forward.1} parent=5 // pred_check
      _
    $region10: #{kutta_nys56_forward.1} parent=5 // pred_check_branch
      %138 = sbr.rel (%p135) target = $region12
    $region11: #{kutta_nys56_forward.1} parent=5 // pred_region
      %s139 = ssub.s32 %s10, 1
      // Predicated region
      $region13: #{kutta_nys56_forward.1} parent=11 // pred_check
        %p140 = pneg %p57
      $region14: #{kutta_nys56_forward.1} parent=11 // pred_check_branch
        %142 = sbr.rel (%p140) target = $region16
      $region15: #{kutta_nys56_forward.1} parent=11 // pred_region
        _
      $region16: #{kutta_nys56_forward.1} parent=11 // pred_fallthru
        _
      // Predicated region
      $region17: #{kutta_nys56_forward.1} parent=11 // pred_check
        %p143 = pneg %p78
      $region18: #{kutta_nys56_forward.1} parent=11 // pred_check_branch
        %145 = sbr.rel (%p143) target = $region20
      $region19: #{kutta_nys56_forward.1} parent=11 // pred_region
        _
      $region20: #{kutta_nys56_forward.1} parent=11 // pred_fallthru
        _
      // Predicated region
      $region21: #{kutta_nys56_forward.1} parent=11 // pred_check
        %p146 = pneg %p99
      $region22: #{kutta_nys56_forward.1} parent=11 // pred_check_branch
        %148 = sbr.rel (%p146) target = $region24
      $region23: #{kutta_nys56_forward.1} parent=11 // pred_region
        _
      $region24: #{kutta_nys56_forward.1} parent=11 // pred_fallthru
        _
    $region12: #{kutta_nys56_forward.1} parent=5 // pred_fallthru
      _
    %p149 = scmp.lt.s32.totalorder %s10, 2
    // Predicated region
    $region25: #{kutta_nys56_forward.1} parent=5 // pred_check
      %p150 = pneg %p149
    $region26: #{kutta_nys56_forward.1} parent=5 // pred_check_branch
      %152 = sbr.rel (%p150) target = $region28
    $region27: #{kutta_nys56_forward.1} parent=5 // pred_region
      // Predicated region
      $region29: #{kutta_nys56_forward.1} parent=27 // pred_check
        %p153 = pneg %p30
      $region30: #{kutta_nys56_forward.1} parent=27 // pred_check_branch
        %155 = sbr.rel (%p153) target = $region32
      $region31: #{kutta_nys56_forward.1} parent=27 // pred_region
        %p156 = scmp.lt.s32.totalorder %s10, 1
        %s157 = scalar_select %p156, %s10, 1
        %s158 = smul.addr %s157, 2
        %s159 = smul.addr %s158, 8
        %s160 = scalar_lea.vmem %s0, %s159
      $region32: #{kutta_nys56_forward.1} parent=27 // pred_fallthru
        _
    $region28: #{kutta_nys56_forward.1} parent=5 // pred_fallthru
      _
    %p161 = scmp.le.s32.totalorder 1, %s10
    %p162 = scmp.lt.s32.totalorder %s10, 3
    %p163 = pnand %p161, %p162
    %p164 = pneg %p163
    // Predicated region
    $region33: #{kutta_nys56_forward.1} parent=5 // pred_check
      _
    $region34: #{kutta_nys56_forward.1} parent=5 // pred_check_branch
      %166 = sbr.rel (%p163) target = $region36
    $region35: #{kutta_nys56_forward.1} parent=5 // pred_region
      %s167 = ssub.s32 %s10, 1
      %p168 = scmp.lt.s32.totalorder %s15, 1
      %s169 = scalar_select %p168, %s15, 1
      %s170 = smul.addr %s169, 2
      %s171 = smul.addr %s170, 8
      %s172 = scalar_lea.vmem %s0, %s171
      %p173 = pneg %p36
      %p174 = pneg %p33
      %p175 = pneg %p57
      %p176 = pneg %p54
      %p177 = pneg %p78
      %p178 = pneg %p75
      %p179 = pneg %p99
      %p180 = pneg %p96
      %p181 = pneg %p125
      %p182 = pneg %p122
      %p183 = scmp.lt.s32.totalorder %s15, 1
      %s184 = scalar_select %p183, %s15, 1
      %s185 = smul.addr %s184, 2
      %s186 = smul.addr %s185, 8
      %s187 = scalar_lea.vmem %s4, %s186
      %p188 = scmp.lt.s32.totalorder %s15, 1
      %s189 = scalar_select %p188, %s15, 1
      %s190 = smul.addr %s189, 2
      %s191 = smul.addr %s190, 8
      %s192 = scalar_lea.vmem %s0, %s191
      %p193 = scmp.lt.s32.totalorder %s15, 1
      %s194 = scalar_select %p193, %s15, 1
      %s195 = smul.addr %s194, 2
      %s196 = smul.addr %s195, 8
      %s197 = scalar_lea.vmem %s4, %s196
      %v198 = vld [vmem:[%s192] sm:$0xff]
      %v199 = vld [vmem:[%s192 + $0x8] sm:$0xff]
      %v200 = vld [vmem:[%s2] sm:$0xff]
      %v201 = vld [vmem:[%s2 + $0x8] sm:$0xf]
      %v202 = vld [vmem:[%s3] sm:$0xff]
      %v203 = vld [vmem:[%s3 + $0x8] sm:$0xf]
      %v204 = vperm.slane %v200, 0
      %v205 = vmul.f32 %v198, %v204
      %v206 = vmul.f32 %v199, %v204
      %v207 = vperm.slane %v202, 0
      %v208 = vadd.f32 %v205, %v207
      %v209 = vadd.f32 %v206, %v207
      %v210 = vmax.f32 %v208, 0.0
      %v211 = vmax.f32 %v209, 0.0
      %vm214 = vcmask 1040384
      %v215 = vrot.slane %v210, 7
      %v216 = vrot.slane %v211, 7
      %v217 = vsel %vm214, %v215, %v216
      %v221 = vsel %vm214, 0.0, %v215
      %v222 = vsel %vm214, %v216, 0.0
      %vm225 = vcmask 1046528
      %v226 = vrot.slane %v221, 1
      %v227 = vrot.slane %v217, 1
      %v228 = vsel %vm225, %v226, %v227
      %v229 = vrot.slane %v222, 1
      %v230 = vsel %vm225, %v227, %v229
      %vm233 = vcmask 1045504
      %v234 = vrot.slane %v221, 2
      %v235 = vrot.slane %v217, 2
      %v236 = vsel %vm233, %v234, %v235
      %v237 = vrot.slane %v222, 2
      %v238 = vsel %vm233, %v235, %v237
      %v241 = vld [vmem:[%s1] sm:$0xff]
      %v242 = vld [vmem:[%s1 + $0x8] sm:$0xff]
      %v243 = vld [vmem:[%s1 + $0x10] sm:$0xff]
      %v244 = vld [vmem:[%s1 + $0x18] sm:$0xff]
      %v245 = vld [vmem:[%s1 + $0x20] sm:$0xff]
      %v246 = vld [vmem:[%s1 + $0x28] sm:$0xff]
      %v247 = vld [vmem:[%s1 + $0x30] sm:$0xff]
      %v248 = vld [vmem:[%s1 + $0x38] sm:$0xff]
      %v249 = vld [vmem:[%s1 + $0x40] sm:$0xff]
      %v250 = vld [vmem:[%s1 + $0x48] sm:$0xff]
      %v251 = vld [vmem:[%s1 + $0x50] sm:$0xff]
      %v252 = vld [vmem:[%s1 + $0x58] sm:$0xff]
      %v253 = vld [vmem:[%s1 + $0x60] sm:$0xff]
      %v254 = vld [vmem:[%s1 + $0x68] sm:$0xff]
      %v255 = vld [vmem:[%s1 + $0x70] sm:$0xff]
      %v256 = vld [vmem:[%s1 + $0x78] sm:$0xff]
      %v257 = vld [vmem:[%s1 + $0x80] sm:$0xff]
      %v258 = vld [vmem:[%s1 + $0x88] sm:$0xff]
      %v259 = vld [vmem:[%s1 + $0x90] sm:$0xff]
      %v260 = vld [vmem:[%s1 + $0x98] sm:$0xff]
      %v261 = vld [vmem:[%s1 + $0xa0] sm:$0xff]
      %v262 = vld [vmem:[%s1 + $0xa8] sm:$0xff]
      %v263 = vld [vmem:[%s1 + $0xb0] sm:$0xff]
      %v264 = vld [vmem:[%s1 + $0xb8] sm:$0xff]
      %v265 = vld [vmem:[%s1 + $0xc0] sm:$0xff]
      %v266 = vld [vmem:[%s1 + $0xc8] sm:$0xff]
      %v267 = vld [vmem:[%s1 + $0xd0] sm:$0xff]
      %v268 = vld [vmem:[%s1 + $0xd8] sm:$0xff]
      %v269 = vld [vmem:[%s1 + $0xe0] sm:$0xff]
      %v270 = vld [vmem:[%s1 + $0xe8] sm:$0xff]
      %v271 = vld [vmem:[%s1 + $0xf0] sm:$0xff]
      %v272 = vld [vmem:[%s1 + $0xf8] sm:$0xff]
      %v273 = vld [vmem:[%s1 + $0x100] sm:$0xff]
      %v274 = vld [vmem:[%s1 + $0x108] sm:$0xff]
      %v275 = vld [vmem:[%s1 + $0x110] sm:$0xff]
      %v276 = vld [vmem:[%s1 + $0x118] sm:$0xff]
      %v277 = vld [vmem:[%s1 + $0x120] sm:$0xff]
      %v278 = vld [vmem:[%s1 + $0x128] sm:$0xff]
      %v279 = vld [vmem:[%s1 + $0x130] sm:$0xff]
      %v280 = vld [vmem:[%s1 + $0x138] sm:$0xff]
      %v281 = vld [vmem:[%s1 + $0x140] sm:$0xff]
      %v282 = vld [vmem:[%s1 + $0x148] sm:$0xff]
      %v283 = vld [vmem:[%s1 + $0x150] sm:$0xff]
      %v284 = vld [vmem:[%s1 + $0x158] sm:$0xff]
      %v285 = vld [vmem:[%s1 + $0x160] sm:$0xff]
      %v286 = vld [vmem:[%s1 + $0x168] sm:$0xff]
      %v287 = vld [vmem:[%s1 + $0x170] sm:$0xff]
      %v288 = vld [vmem:[%s1 + $0x178] sm:$0xff]
      %289 = vmatpush.msra.mxu0 %v256
      %290 = vmatpush.msra.mxu0 %v255
      %291 = vmatpush.msra.mxu0 %v254
      %292 = vmatpush.msra.mxu0 %v253
      %293 = vmatpush.msra.mxu0 %v252
      %294 = vmatpush.msra.mxu0 %v251
      %295 = vmatpush.msra.mxu0 %v250
      %296 = vmatpush.msra.mxu0 %v249
      %297 = vmatpush.msra.mxu0 %v248
      %298 = vmatpush.msra.mxu0 %v247
      %299 = vmatpush.msra.mxu0 %v246
      %300 = vmatpush.msra.mxu0 %v245
      %301 = vmatpush.msra.mxu0 %v244
      %302 = vmatpush.msra.mxu0 %v243
      %303 = vmatpush.msra.mxu0 %v242
      %304 = vmatpush.msra.mxu0 %v241
      %305 = vmatmul.f32.gmra.mxu0 %v221
      %v306 = vpop.f32.mrf.mxu0
      %v307 = vadd.f32 0.0, %v306
      %308 = vmatmul.f32.gmra.mxu0 %v217
      %v309 = vpop.f32.mrf.mxu0
      %v310 = vadd.f32 0.0, %v309
      %311 = vdwg.mxu0
      %312 = vmatpush.msra.mxu0 %v272
      %313 = vmatpush.msra.mxu0 %v271
      %314 = vmatpush.msra.mxu0 %v270
      %315 = vmatpush.msra.mxu0 %v269
      %316 = vmatpush.msra.mxu0 %v268
      %317 = vmatpush.msra.mxu0 %v267
      %318 = vmatpush.msra.mxu0 %v266
      %319 = vmatpush.msra.mxu0 %v265
      %320 = vmatpush.msra.mxu0 %v264
      %321 = vmatpush.msra.mxu0 %v263
      %322 = vmatpush.msra.mxu0 %v262
      %323 = vmatpush.msra.mxu0 %v261
      %324 = vmatpush.msra.mxu0 %v260
      %325 = vmatpush.msra.mxu0 %v259
      %326 = vmatpush.msra.mxu0 %v258
      %327 = vmatpush.msra.mxu0 %v257
      %328 = vmatmul.f32.gmra.mxu0 %v228
      %v329 = vpop.f32.mrf.mxu0
      %v330 = vadd.f32 %v307, %v329
      %331 = vmatmul.f32.gmra.mxu0 %v230
      %v332 = vpop.f32.mrf.mxu0
      %v333 = vadd.f32 %v310, %v332
      %334 = vdwg.mxu0
      %335 = vmatpush.msra.mxu0 %v288
      %336 = vmatpush.msra.mxu0 %v287
      %337 = vmatpush.msra.mxu0 %v286
      %338 = vmatpush.msra.mxu0 %v285
      %339 = vmatpush.msra.mxu0 %v284
      %340 = vmatpush.msra.mxu0 %v283
      %341 = vmatpush.msra.mxu0 %v282
      %342 = vmatpush.msra.mxu0 %v281
      %343 = vmatpush.msra.mxu0 %v280
      %344 = vmatpush.msra.mxu0 %v279
      %345 = vmatpush.msra.mxu0 %v278
      %346 = vmatpush.msra.mxu0 %v277
      %347 = vmatpush.msra.mxu0 %v276
      %348 = vmatpush.msra.mxu0 %v275
      %349 = vmatpush.msra.mxu0 %v274
      %350 = vmatpush.msra.mxu0 %v273
      %351 = vmatmul.f32.gmra.mxu0 %v236
      %v352 = vpop.f32.mrf.mxu0
      %v353 = vadd.f32 %v330, %v352
      %354 = vmatmul.f32.gmra.mxu0 %v238
      %v355 = vpop.f32.mrf.mxu0
      %v356 = vadd.f32 %v333, %v355
      %357 = vdwg.mxu0
      %v358 = vperm.slane %v200, 1
      %v359 = vmul.f32 %v353, %v358
      %v360 = vmul.f32 %v356, %v358
      %v361 = vperm.slane %v202, 1
      %v362 = vadd.f32 %v359, %v361
      %v363 = vadd.f32 %v360, %v361
      %v364 = vmax.f32 %v362, 0.0
      %v365 = vmax.f32 %v363, 0.0
      %v368 = vrot.slane %v364, 7
      %v369 = vrot.slane %v365, 7
      %v370 = vsel %vm214, %v368, %v369
      %v374 = vsel %vm214, 0.0, %v368
      %v375 = vsel %vm214, %v369, 0.0
      %v378 = vrot.slane %v374, 1
      %v379 = vrot.slane %v370, 1
      %v380 = vsel %vm225, %v378, %v379
      %v381 = vrot.slane %v375, 1
      %v382 = vsel %vm225, %v379, %v381
      %v385 = vrot.slane %v374, 2
      %v386 = vrot.slane %v370, 2
      %v387 = vsel %vm233, %v385, %v386
      %v388 = vrot.slane %v375, 2
      %v389 = vsel %vm233, %v386, %v388
      %s392 = scalar_lea.vmem %s1, 384
      %v393 = vld [vmem:[%s392] sm:$0xff]
      %v394 = vld [vmem:[%s392 + $0x8] sm:$0xff]
      %v395 = vld [vmem:[%s392 + $0x10] sm:$0xff]
      %v396 = vld [vmem:[%s392 + $0x18] sm:$0xff]
      %v397 = vld [vmem:[%s392 + $0x20] sm:$0xff]
      %v398 = vld [vmem:[%s392 + $0x28] sm:$0xff]
      %v399 = vld [vmem:[%s392 + $0x30] sm:$0xff]
      %v400 = vld [vmem:[%s392 + $0x38] sm:$0xff]
      %v401 = vld [vmem:[%s392 + $0x40] sm:$0xff]
      %v402 = vld [vmem:[%s392 + $0x48] sm:$0xff]
      %v403 = vld [vmem:[%s392 + $0x50] sm:$0xff]
      %v404 = vld [vmem:[%s392 + $0x58] sm:$0xff]
      %v405 = vld [vmem:[%s392 + $0x60] sm:$0xff]
      %v406 = vld [vmem:[%s392 + $0x68] sm:$0xff]
      %v407 = vld [vmem:[%s392 + $0x70] sm:$0xff]
      %v408 = vld [vmem:[%s392 + $0x78] sm:$0xff]
      %v409 = vld [vmem:[%s392 + $0x80] sm:$0xff]
      %v410 = vld [vmem:[%s392 + $0x88] sm:$0xff]
      %v411 = vld [vmem:[%s392 + $0x90] sm:$0xff]
      %v412 = vld [vmem:[%s392 + $0x98] sm:$0xff]
      %v413 = vld [vmem:[%s392 + $0xa0] sm:$0xff]
      %v414 = vld [vmem:[%s392 + $0xa8] sm:$0xff]
      %v415 = vld [vmem:[%s392 + $0xb0] sm:$0xff]
      %v416 = vld [vmem:[%s392 + $0xb8] sm:$0xff]
      %v417 = vld [vmem:[%s392 + $0xc0] sm:$0xff]
      %v418 = vld [vmem:[%s392 + $0xc8] sm:$0xff]
      %v419 = vld [vmem:[%s392 + $0xd0] sm:$0xff]
      %v420 = vld [vmem:[%s392 + $0xd8] sm:$0xff]
      %v421 = vld [vmem:[%s392 + $0xe0] sm:$0xff]
      %v422 = vld [vmem:[%s392 + $0xe8] sm:$0xff]
      %v423 = vld [vmem:[%s392 + $0xf0] sm:$0xff]
      %v424 = vld [vmem:[%s392 + $0xf8] sm:$0xff]
      %v425 = vld [vmem:[%s392 + $0x100] sm:$0xff]
      %v426 = vld [vmem:[%s392 + $0x108] sm:$0xff]
      %v427 = vld [vmem:[%s392 + $0x110] sm:$0xff]
      %v428 = vld [vmem:[%s392 + $0x118] sm:$0xff]
      %v429 = vld [vmem:[%s392 + $0x120] sm:$0xff]
      %v430 = vld [vmem:[%s392 + $0x128] sm:$0xff]
      %v431 = vld [vmem:[%s392 + $0x130] sm:$0xff]
      %v432 = vld [vmem:[%s392 + $0x138] sm:$0xff]
      %v433 = vld [vmem:[%s392 + $0x140] sm:$0xff]
      %v434 = vld [vmem:[%s392 + $0x148] sm:$0xff]
      %v435 = vld [vmem:[%s392 + $0x150] sm:$0xff]
      %v436 = vld [vmem:[%s392 + $0x158] sm:$0xff]
      %v437 = vld [vmem:[%s392 + $0x160] sm:$0xff]
      %v438 = vld [vmem:[%s392 + $0x168] sm:$0xff]
      %v439 = vld [vmem:[%s392 + $0x170] sm:$0xff]
      %v440 = vld [vmem:[%s392 + $0x178] sm:$0xff]
      %441 = vmatpush.msra.mxu0 %v408
      %442 = vmatpush.msra.mxu0 %v407
      %443 = vmatpush.msra.mxu0 %v406
      %444 = vmatpush.msra.mxu0 %v405
      %445 = vmatpush.msra.mxu0 %v404
      %446 = vmatpush.msra.mxu0 %v403
      %447 = vmatpush.msra.mxu0 %v402
      %448 = vmatpush.msra.mxu0 %v401
      %449 = vmatpush.msra.mxu0 %v400
      %450 = vmatpush.msra.mxu0 %v399
      %451 = vmatpush.msra.mxu0 %v398
      %452 = vmatpush.msra.mxu0 %v397
      %453 = vmatpush.msra.mxu0 %v396
      %454 = vmatpush.msra.mxu0 %v395
      %455 = vmatpush.msra.mxu0 %v394
      %456 = vmatpush.msra.mxu0 %v393
      %457 = vmatmul.f32.gmra.mxu0 %v374
      %v458 = vpop.f32.mrf.mxu0
      %v459 = vadd.f32 0.0, %v458
      %460 = vmatmul.f32.gmra.mxu0 %v370
      %v461 = vpop.f32.mrf.mxu0
      %v462 = vadd.f32 0.0, %v461
      %463 = vdwg.mxu0
      %464 = vmatpush.msra.mxu0 %v424
      %465 = vmatpush.msra.mxu0 %v423
      %466 = vmatpush.msra.mxu0 %v422
      %467 = vmatpush.msra.mxu0 %v421
      %468 = vmatpush.msra.mxu0 %v420
      %469 = vmatpush.msra.mxu0 %v419
      %470 = vmatpush.msra.mxu0 %v418
      %471 = vmatpush.msra.mxu0 %v417
      %472 = vmatpush.msra.mxu0 %v416
      %473 = vmatpush.msra.mxu0 %v415
      %474 = vmatpush.msra.mxu0 %v414
      %475 = vmatpush.msra.mxu0 %v413
      %476 = vmatpush.msra.mxu0 %v412
      %477 = vmatpush.msra.mxu0 %v411
      %478 = vmatpush.msra.mxu0 %v410
      %479 = vmatpush.msra.mxu0 %v409
      %480 = vmatmul.f32.gmra.mxu0 %v380
      %v481 = vpop.f32.mrf.mxu0
      %v482 = vadd.f32 %v459, %v481
      %483 = vmatmul.f32.gmra.mxu0 %v382
      %v484 = vpop.f32.mrf.mxu0
      %v485 = vadd.f32 %v462, %v484
      %486 = vdwg.mxu0
      %487 = vmatpush.msra.mxu0 %v440
      %488 = vmatpush.msra.mxu0 %v439
      %489 = vmatpush.msra.mxu0 %v438
      %490 = vmatpush.msra.mxu0 %v437
      %491 = vmatpush.msra.mxu0 %v436
      %492 = vmatpush.msra.mxu0 %v435
      %493 = vmatpush.msra.mxu0 %v434
      %494 = vmatpush.msra.mxu0 %v433
      %495 = vmatpush.msra.mxu0 %v432
      %496 = vmatpush.msra.mxu0 %v431
      %497 = vmatpush.msra.mxu0 %v430
      %498 = vmatpush.msra.mxu0 %v429
      %499 = vmatpush.msra.mxu0 %v428
      %500 = vmatpush.msra.mxu0 %v427
      %501 = vmatpush.msra.mxu0 %v426
      %502 = vmatpush.msra.mxu0 %v425
      %503 = vmatmul.f32.gmra.mxu0 %v387
      %v504 = vpop.f32.mrf.mxu0
      %v505 = vadd.f32 %v482, %v504
      %506 = vmatmul.f32.gmra.mxu0 %v389
      %v507 = vpop.f32.mrf.mxu0
      %v508 = vadd.f32 %v485, %v507
      %509 = vdwg.mxu0
      %v510 = vmul.f32 %v505, 0.33333334
      %v511 = vmul.f32 %v508, 0.33333334
      %v512 = vadd.f32 %v510, %v198
      %v513 = vadd.f32 %v511, %v199
      %v514 = vperm.slane %v200, 2
      %v515 = vmul.f32 %v512, %v514
      %v516 = vmul.f32 %v513, %v514
      %v517 = vperm.slane %v202, 2
      %v518 = vadd.f32 %v515, %v517
      %v519 = vadd.f32 %v516, %v517
      %v520 = vmax.f32 %v518, 0.0
      %v521 = vmax.f32 %v519, 0.0
      %v524 = vrot.slane %v520, 7
      %v525 = vrot.slane %v521, 7
      %v526 = vsel %vm214, %v524, %v525
      %v530 = vsel %vm214, 0.0, %v524
      %v531 = vsel %vm214, %v525, 0.0
      %v534 = vrot.slane %v530, 1
      %v535 = vrot.slane %v526, 1
      %v536 = vsel %vm225, %v534, %v535
      %v537 = vrot.slane %v531, 1
      %v538 = vsel %vm225, %v535, %v537
      %v541 = vrot.slane %v530, 2
      %v542 = vrot.slane %v526, 2
      %v543 = vsel %vm233, %v541, %v542
      %v544 = vrot.slane %v531, 2
      %v545 = vsel %vm233, %v542, %v544
      %s548 = scalar_lea.vmem %s1, 768
      %v549 = vld [vmem:[%s548] sm:$0xff]
      %v550 = vld [vmem:[%s548 + $0x8] sm:$0xff]
      %v551 = vld [vmem:[%s548 + $0x10] sm:$0xff]
      %v552 = vld [vmem:[%s548 + $0x18] sm:$0xff]
      %v553 = vld [vmem:[%s548 + $0x20] sm:$0xff]
      %v554 = vld [vmem:[%s548 + $0x28] sm:$0xff]
      %v555 = vld [vmem:[%s548 + $0x30] sm:$0xff]
      %v556 = vld [vmem:[%s548 + $0x38] sm:$0xff]
      %v557 = vld [vmem:[%s548 + $0x40] sm:$0xff]
      %v558 = vld [vmem:[%s548 + $0x48] sm:$0xff]
      %v559 = vld [vmem:[%s548 + $0x50] sm:$0xff]
      %v560 = vld [vmem:[%s548 + $0x58] sm:$0xff]
      %v561 = vld [vmem:[%s548 + $0x60] sm:$0xff]
      %v562 = vld [vmem:[%s548 + $0x68] sm:$0xff]
      %v563 = vld [vmem:[%s548 + $0x70] sm:$0xff]
      %v564 = vld [vmem:[%s548 + $0x78] sm:$0xff]
      %v565 = vld [vmem:[%s548 + $0x80] sm:$0xff]
      %v566 = vld [vmem:[%s548 + $0x88] sm:$0xff]
      %v567 = vld [vmem:[%s548 + $0x90] sm:$0xff]
      %v568 = vld [vmem:[%s548 + $0x98] sm:$0xff]
      %v569 = vld [vmem:[%s548 + $0xa0] sm:$0xff]
      %v570 = vld [vmem:[%s548 + $0xa8] sm:$0xff]
      %v571 = vld [vmem:[%s548 + $0xb0] sm:$0xff]
      %v572 = vld [vmem:[%s548 + $0xb8] sm:$0xff]
      %v573 = vld [vmem:[%s548 + $0xc0] sm:$0xff]
      %v574 = vld [vmem:[%s548 + $0xc8] sm:$0xff]
      %v575 = vld [vmem:[%s548 + $0xd0] sm:$0xff]
      %v576 = vld [vmem:[%s548 + $0xd8] sm:$0xff]
      %v577 = vld [vmem:[%s548 + $0xe0] sm:$0xff]
      %v578 = vld [vmem:[%s548 + $0xe8] sm:$0xff]
      %v579 = vld [vmem:[%s548 + $0xf0] sm:$0xff]
      %v580 = vld [vmem:[%s548 + $0xf8] sm:$0xff]
      %v581 = vld [vmem:[%s548 + $0x100] sm:$0xff]
      %v582 = vld [vmem:[%s548 + $0x108] sm:$0xff]
      %v583 = vld [vmem:[%s548 + $0x110] sm:$0xff]
      %v584 = vld [vmem:[%s548 + $0x118] sm:$0xff]
      %v585 = vld [vmem:[%s548 + $0x120] sm:$0xff]
      %v586 = vld [vmem:[%s548 + $0x128] sm:$0xff]
      %v587 = vld [vmem:[%s548 + $0x130] sm:$0xff]
      %v588 = vld [vmem:[%s548 + $0x138] sm:$0xff]
      %v589 = vld [vmem:[%s548 + $0x140] sm:$0xff]
      %v590 = vld [vmem:[%s548 + $0x148] sm:$0xff]
      %v591 = vld [vmem:[%s548 + $0x150] sm:$0xff]
      %v592 = vld [vmem:[%s548 + $0x158] sm:$0xff]
      %v593 = vld [vmem:[%s548 + $0x160] sm:$0xff]
      %v594 = vld [vmem:[%s548 + $0x168] sm:$0xff]
      %v595 = vld [vmem:[%s548 + $0x170] sm:$0xff]
      %v596 = vld [vmem:[%s548 + $0x178] sm:$0xff]
      %597 = vmatpush.msra.mxu0 %v564
      %598 = vmatpush.msra.mxu0 %v563
      %599 = vmatpush.msra.mxu0 %v562
      %600 = vmatpush.msra.mxu0 %v561
      %601 = vmatpush.msra.mxu0 %v560
      %602 = vmatpush.msra.mxu0 %v559
      %603 = vmatpush.msra.mxu0 %v558
      %604 = vmatpush.msra.mxu0 %v557
      %605 = vmatpush.msra.mxu0 %v556
      %606 = vmatpush.msra.mxu0 %v555
      %607 = vmatpush.msra.mxu0 %v554
      %608 = vmatpush.msra.mxu0 %v553
      %609 = vmatpush.msra.mxu0 %v552
      %610 = vmatpush.msra.mxu0 %v551
      %611 = vmatpush.msra.mxu0 %v550
      %612 = vmatpush.msra.mxu0 %v549
      %613 = vmatmul.f32.gmra.mxu0 %v530
      %v614 = vpop.f32.mrf.mxu0
      %v615 = vadd.f32 0.0, %v614
      %616 = vmatmul.f32.gmra.mxu0 %v526
      %v617 = vpop.f32.mrf.mxu0
      %v618 = vadd.f32 0.0, %v617
      %619 = vdwg.mxu0
      %620 = vmatpush.msra.mxu0 %v580
      %621 = vmatpush.msra.mxu0 %v579
      %622 = vmatpush.msra.mxu0 %v578
      %623 = vmatpush.msra.mxu0 %v577
      %624 = vmatpush.msra.mxu0 %v576
      %625 = vmatpush.msra.mxu0 %v575
      %626 = vmatpush.msra.mxu0 %v574
      %627 = vmatpush.msra.mxu0 %v573
      %628 = vmatpush.msra.mxu0 %v572
      %629 = vmatpush.msra.mxu0 %v571
      %630 = vmatpush.msra.mxu0 %v570
      %631 = vmatpush.msra.mxu0 %v569
      %632 = vmatpush.msra.mxu0 %v568
      %633 = vmatpush.msra.mxu0 %v567
      %634 = vmatpush.msra.mxu0 %v566
      %635 = vmatpush.msra.mxu0 %v565
      %636 = vmatmul.f32.gmra.mxu0 %v536
      %v637 = vpop.f32.mrf.mxu0
      %v638 = vadd.f32 %v615, %v637
      %639 = vmatmul.f32.gmra.mxu0 %v538
      %v640 = vpop.f32.mrf.mxu0
      %v641 = vadd.f32 %v618, %v640
      %642 = vdwg.mxu0
      %643 = vmatpush.msra.mxu0 %v596
      %644 = vmatpush.msra.mxu0 %v595
      %645 = vmatpush.msra.mxu0 %v594
      %646 = vmatpush.msra.mxu0 %v593
      %647 = vmatpush.msra.mxu0 %v592
      %648 = vmatpush.msra.mxu0 %v591
      %649 = vmatpush.msra.mxu0 %v590
      %650 = vmatpush.msra.mxu0 %v589
      %651 = vmatpush.msra.mxu0 %v588
      %652 = vmatpush.msra.mxu0 %v587
      %653 = vmatpush.msra.mxu0 %v586
      %654 = vmatpush.msra.mxu0 %v585
      %655 = vmatpush.msra.mxu0 %v584
      %656 = vmatpush.msra.mxu0 %v583
      %657 = vmatpush.msra.mxu0 %v582
      %658 = vmatpush.msra.mxu0 %v581
      %659 = vmatmul.f32.gmra.mxu0 %v543
      %v660 = vpop.f32.mrf.mxu0
      %v661 = vadd.f32 %v638, %v660
      %662 = vmatmul.f32.gmra.mxu0 %v545
      %v663 = vpop.f32.mrf.mxu0
      %v664 = vadd.f32 %v641, %v663
      %665 = vdwg.mxu0
      %v666 = vperm.slane %v200, 3
      %v667 = vmul.f32 %v661, %v666
      %v668 = vmul.f32 %v664, %v666
      %v669 = vperm.slane %v202, 3
      %v670 = vadd.f32 %v667, %v669
      %v671 = vadd.f32 %v668, %v669
      %v672 = vmax.f32 %v670, 0.0
      %v673 = vmax.f32 %v671, 0.0
      %v676 = vrot.slane %v672, 7
      %v677 = vrot.slane %v673, 7
      %v678 = vsel %vm214, %v676, %v677
      %v682 = vsel %vm214, 0.0, %v676
      %v683 = vsel %vm214, %v677, 0.0
      %v686 = vrot.slane %v682, 1
      %v687 = vrot.slane %v678, 1
      %v688 = vsel %vm225, %v686, %v687
      %v689 = vrot.slane %v683, 1
      %v690 = vsel %vm225, %v687, %v689
      %v693 = vrot.slane %v682, 2
      %v694 = vrot.slane %v678, 2
      %v695 = vsel %vm233, %v693, %v694
      %v696 = vrot.slane %v683, 2
      %v697 = vsel %vm233, %v694, %v696
      %s700 = scalar_lea.vmem %s1, 1152
      %v701 = vld [vmem:[%s700] sm:$0xff]
      %v702 = vld [vmem:[%s700 + $0x8] sm:$0xff]
      %v703 = vld [vmem:[%s700 + $0x10] sm:$0xff]
      %v704 = vld [vmem:[%s700 + $0x18] sm:$0xff]
      %v705 = vld [vmem:[%s700 + $0x20] sm:$0xff]
      %v706 = vld [vmem:[%s700 + $0x28] sm:$0xff]
      %v707 = vld [vmem:[%s700 + $0x30] sm:$0xff]
      %v708 = vld [vmem:[%s700 + $0x38] sm:$0xff]
      %v709 = vld [vmem:[%s700 + $0x40] sm:$0xff]
      %v710 = vld [vmem:[%s700 + $0x48] sm:$0xff]
      %v711 = vld [vmem:[%s700 + $0x50] sm:$0xff]
      %v712 = vld [vmem:[%s700 + $0x58] sm:$0xff]
      %v713 = vld [vmem:[%s700 + $0x60] sm:$0xff]
      %v714 = vld [vmem:[%s700 + $0x68] sm:$0xff]
      %v715 = vld [vmem:[%s700 + $0x70] sm:$0xff]
      %v716 = vld [vmem:[%s700 + $0x78] sm:$0xff]
      %v717 = vld [vmem:[%s700 + $0x80] sm:$0xff]
      %v718 = vld [vmem:[%s700 + $0x88] sm:$0xff]
      %v719 = vld [vmem:[%s700 + $0x90] sm:$0xff]
      %v720 = vld [vmem:[%s700 + $0x98] sm:$0xff]
      %v721 = vld [vmem:[%s700 + $0xa0] sm:$0xff]
      %v722 = vld [vmem:[%s700 + $0xa8] sm:$0xff]
      %v723 = vld [vmem:[%s700 + $0xb0] sm:$0xff]
      %v724 = vld [vmem:[%s700 + $0xb8] sm:$0xff]
      %v725 = vld [vmem:[%s700 + $0xc0] sm:$0xff]
      %v726 = vld [vmem:[%s700 + $0xc8] sm:$0xff]
      %v727 = vld [vmem:[%s700 + $0xd0] sm:$0xff]
      %v728 = vld [vmem:[%s700 + $0xd8] sm:$0xff]
      %v729 = vld [vmem:[%s700 + $0xe0] sm:$0xff]
      %v730 = vld [vmem:[%s700 + $0xe8] sm:$0xff]
      %v731 = vld [vmem:[%s700 + $0xf0] sm:$0xff]
      %v732 = vld [vmem:[%s700 + $0xf8] sm:$0xff]
      %v733 = vld [vmem:[%s700 + $0x100] sm:$0xff]
      %v734 = vld [vmem:[%s700 + $0x108] sm:$0xff]
      %v735 = vld [vmem:[%s700 + $0x110] sm:$0xff]
      %v736 = vld [vmem:[%s700 + $0x118] sm:$0xff]
      %v737 = vld [vmem:[%s700 + $0x120] sm:$0xff]
      %v738 = vld [vmem:[%s700 + $0x128] sm:$0xff]
      %v739 = vld [vmem:[%s700 + $0x130] sm:$0xff]
      %v740 = vld [vmem:[%s700 + $0x138] sm:$0xff]
      %v741 = vld [vmem:[%s700 + $0x140] sm:$0xff]
      %v742 = vld [vmem:[%s700 + $0x148] sm:$0xff]
      %v743 = vld [vmem:[%s700 + $0x150] sm:$0xff]
      %v744 = vld [vmem:[%s700 + $0x158] sm:$0xff]
      %v745 = vld [vmem:[%s700 + $0x160] sm:$0xff]
      %v746 = vld [vmem:[%s700 + $0x168] sm:$0xff]
      %v747 = vld [vmem:[%s700 + $0x170] sm:$0xff]
      %v748 = vld [vmem:[%s700 + $0x178] sm:$0xff]
      %749 = vmatpush.msra.mxu0 %v716
      %750 = vmatpush.msra.mxu0 %v715
      %751 = vmatpush.msra.mxu0 %v714
      %752 = vmatpush.msra.mxu0 %v713
      %753 = vmatpush.msra.mxu0 %v712
      %754 = vmatpush.msra.mxu0 %v711
      %755 = vmatpush.msra.mxu0 %v710
      %756 = vmatpush.msra.mxu0 %v709
      %757 = vmatpush.msra.mxu0 %v708
      %758 = vmatpush.msra.mxu0 %v707
      %759 = vmatpush.msra.mxu0 %v706
      %760 = vmatpush.msra.mxu0 %v705
      %761 = vmatpush.msra.mxu0 %v704
      %762 = vmatpush.msra.mxu0 %v703
      %763 = vmatpush.msra.mxu0 %v702
      %764 = vmatpush.msra.mxu0 %v701
      %765 = vmatmul.f32.gmra.mxu0 %v682
      %v766 = vpop.f32.mrf.mxu0
      %v767 = vadd.f32 0.0, %v766
      %768 = vmatmul.f32.gmra.mxu0 %v678
      %v769 = vpop.f32.mrf.mxu0
      %v770 = vadd.f32 0.0, %v769
      %771 = vdwg.mxu0
      %772 = vmatpush.msra.mxu0 %v732
      %773 = vmatpush.msra.mxu0 %v731
      %774 = vmatpush.msra.mxu0 %v730
      %775 = vmatpush.msra.mxu0 %v729
      %776 = vmatpush.msra.mxu0 %v728
      %777 = vmatpush.msra.mxu0 %v727
      %778 = vmatpush.msra.mxu0 %v726
      %779 = vmatpush.msra.mxu0 %v725
      %780 = vmatpush.msra.mxu0 %v724
      %781 = vmatpush.msra.mxu0 %v723
      %782 = vmatpush.msra.mxu0 %v722
      %783 = vmatpush.msra.mxu0 %v721
      %784 = vmatpush.msra.mxu0 %v720
      %785 = vmatpush.msra.mxu0 %v719
      %786 = vmatpush.msra.mxu0 %v718
      %787 = vmatpush.msra.mxu0 %v717
      %788 = vmatmul.f32.gmra.mxu0 %v688
      %v789 = vpop.f32.mrf.mxu0
      %v790 = vadd.f32 %v767, %v789
      %791 = vmatmul.f32.gmra.mxu0 %v690
      %v792 = vpop.f32.mrf.mxu0
      %v793 = vadd.f32 %v770, %v792
      %794 = vdwg.mxu0
      %795 = vmatpush.msra.mxu0 %v748
      %796 = vmatpush.msra.mxu0 %v747
      %797 = vmatpush.msra.mxu0 %v746
      %798 = vmatpush.msra.mxu0 %v745
      %799 = vmatpush.msra.mxu0 %v744
      %800 = vmatpush.msra.mxu0 %v743
      %801 = vmatpush.msra.mxu0 %v742
      %802 = vmatpush.msra.mxu0 %v741
      %803 = vmatpush.msra.mxu0 %v740
      %804 = vmatpush.msra.mxu0 %v739
      %805 = vmatpush.msra.mxu0 %v738
      %806 = vmatpush.msra.mxu0 %v737
      %807 = vmatpush.msra.mxu0 %v736
      %808 = vmatpush.msra.mxu0 %v735
      %809 = vmatpush.msra.mxu0 %v734
      %810 = vmatpush.msra.mxu0 %v733
      %811 = vmatmul.f32.gmra.mxu0 %v695
      %v812 = vpop.f32.mrf.mxu0
      %v813 = vadd.f32 %v790, %v812
      %814 = vmatmul.f32.gmra.mxu0 %v697
      %v815 = vpop.f32.mrf.mxu0
      %v816 = vadd.f32 %v793, %v815
      %817 = vdwg.mxu0
      %v818 = vmul.f32 %v505, 4.0
      %v819 = vmul.f32 %v508, 4.0
      %v820 = vmul.f32 %v813, 6.0
      %v821 = vmul.f32 %v816, 6.0
      %v822 = vadd.f32 %v818, %v820
      %v823 = vadd.f32 %v819, %v821
      %v824 = vmul.f32 %v822, 0.04
      %v825 = vmul.f32 %v823, 0.04
      %v826 = vadd.f32 %v824, %v198
      %v827 = vadd.f32 %v825, %v199
      %v828 = vperm.slane %v200, 4
      %v829 = vmul.f32 %v826, %v828
      %v830 = vmul.f32 %v827, %v828
      %v831 = vperm.slane %v202, 4
      %v832 = vadd.f32 %v829, %v831
      %v833 = vadd.f32 %v830, %v831
      %v834 = vmax.f32 %v832, 0.0
      %v835 = vmax.f32 %v833, 0.0
      %v838 = vrot.slane %v834, 7
      %v839 = vrot.slane %v835, 7
      %v840 = vsel %vm214, %v838, %v839
      %v844 = vsel %vm214, 0.0, %v838
      %v845 = vsel %vm214, %v839, 0.0
      %v848 = vrot.slane %v844, 1
      %v849 = vrot.slane %v840, 1
      %v850 = vsel %vm225, %v848, %v849
      %v851 = vrot.slane %v845, 1
      %v852 = vsel %vm225, %v849, %v851
      %v855 = vrot.slane %v844, 2
      %v856 = vrot.slane %v840, 2
      %v857 = vsel %vm233, %v855, %v856
      %v858 = vrot.slane %v845, 2
      %v859 = vsel %vm233, %v856, %v858
      %s862 = scalar_lea.vmem %s1, 1536
      %v863 = vld [vmem:[%s862] sm:$0xff]
      %v864 = vld [vmem:[%s862 + $0x8] sm:$0xff]
      %v865 = vld [vmem:[%s862 + $0x10] sm:$0xff]
      %v866 = vld [vmem:[%s862 + $0x18] sm:$0xff]
      %v867 = vld [vmem:[%s862 + $0x20] sm:$0xff]
      %v868 = vld [vmem:[%s862 + $0x28] sm:$0xff]
      %v869 = vld [vmem:[%s862 + $0x30] sm:$0xff]
      %v870 = vld [vmem:[%s862 + $0x38] sm:$0xff]
      %v871 = vld [vmem:[%s862 + $0x40] sm:$0xff]
      %v872 = vld [vmem:[%s862 + $0x48] sm:$0xff]
      %v873 = vld [vmem:[%s862 + $0x50] sm:$0xff]
      %v874 = vld [vmem:[%s862 + $0x58] sm:$0xff]
      %v875 = vld [vmem:[%s862 + $0x60] sm:$0xff]
      %v876 = vld [vmem:[%s862 + $0x68] sm:$0xff]
      %v877 = vld [vmem:[%s862 + $0x70] sm:$0xff]
      %v878 = vld [vmem:[%s862 + $0x78] sm:$0xff]
      %v879 = vld [vmem:[%s862 + $0x80] sm:$0xff]
      %v880 = vld [vmem:[%s862 + $0x88] sm:$0xff]
      %v881 = vld [vmem:[%s862 + $0x90] sm:$0xff]
      %v882 = vld [vmem:[%s862 + $0x98] sm:$0xff]
      %v883 = vld [vmem:[%s862 + $0xa0] sm:$0xff]
      %v884 = vld [vmem:[%s862 + $0xa8] sm:$0xff]
      %v885 = vld [vmem:[%s862 + $0xb0] sm:$0xff]
      %v886 = vld [vmem:[%s862 + $0xb8] sm:$0xff]
      %v887 = vld [vmem:[%s862 + $0xc0] sm:$0xff]
      %v888 = vld [vmem:[%s862 + $0xc8] sm:$0xff]
      %v889 = vld [vmem:[%s862 + $0xd0] sm:$0xff]
      %v890 = vld [vmem:[%s862 + $0xd8] sm:$0xff]
      %v891 = vld [vmem:[%s862 + $0xe0] sm:$0xff]
      %v892 = vld [vmem:[%s862 + $0xe8] sm:$0xff]
      %v893 = vld [vmem:[%s862 + $0xf0] sm:$0xff]
      %v894 = vld [vmem:[%s862 + $0xf8] sm:$0xff]
      %v895 = vld [vmem:[%s862 + $0x100] sm:$0xff]
      %v896 = vld [vmem:[%s862 + $0x108] sm:$0xff]
      %v897 = vld [vmem:[%s862 + $0x110] sm:$0xff]
      %v898 = vld [vmem:[%s862 + $0x118] sm:$0xff]
      %v899 = vld [vmem:[%s862 + $0x120] sm:$0xff]
      %v900 = vld [vmem:[%s862 + $0x128] sm:$0xff]
      %v901 = vld [vmem:[%s862 + $0x130] sm:$0xff]
      %v902 = vld [vmem:[%s862 + $0x138] sm:$0xff]
      %v903 = vld [vmem:[%s862 + $0x140] sm:$0xff]
      %v904 = vld [vmem:[%s862 + $0x148] sm:$0xff]
      %v905 = vld [vmem:[%s862 + $0x150] sm:$0xff]
      %v906 = vld [vmem:[%s862 + $0x158] sm:$0xff]
      %v907 = vld [vmem:[%s862 + $0x160] sm:$0xff]
      %v908 = vld [vmem:[%s862 + $0x168] sm:$0xff]
      %v909 = vld [vmem:[%s862 + $0x170] sm:$0xff]
      %v910 = vld [vmem:[%s862 + $0x178] sm:$0xff]
      %911 = vmatpush.msra.mxu0 %v878
      %912 = vmatpush.msra.mxu0 %v877
      %913 = vmatpush.msra.mxu0 %v876
      %914 = vmatpush.msra.mxu0 %v875
      %915 = vmatpush.msra.mxu0 %v874
      %916 = vmatpush.msra.mxu0 %v873
      %917 = vmatpush.msra.mxu0 %v872
      %918 = vmatpush.msra.mxu0 %v871
      %919 = vmatpush.msra.mxu0 %v870
      %920 = vmatpush.msra.mxu0 %v869
      %921 = vmatpush.msra.mxu0 %v868
      %922 = vmatpush.msra.mxu0 %v867
      %923 = vmatpush.msra.mxu0 %v866
      %924 = vmatpush.msra.mxu0 %v865
      %925 = vmatpush.msra.mxu0 %v864
      %926 = vmatpush.msra.mxu0 %v863
      %927 = vmatmul.f32.gmra.mxu0 %v844
      %v928 = vpop.f32.mrf.mxu0
      %v929 = vadd.f32 0.0, %v928
      %930 = vmatmul.f32.gmra.mxu0 %v840
      %v931 = vpop.f32.mrf.mxu0
      %v932 = vadd.f32 0.0, %v931
      %933 = vdwg.mxu0
      %934 = vmatpush.msra.mxu0 %v894
      %935 = vmatpush.msra.mxu0 %v893
      %936 = vmatpush.msra.mxu0 %v892
      %937 = vmatpush.msra.mxu0 %v891
      %938 = vmatpush.msra.mxu0 %v890
      %939 = vmatpush.msra.mxu0 %v889
      %940 = vmatpush.msra.mxu0 %v888
      %941 = vmatpush.msra.mxu0 %v887
      %942 = vmatpush.msra.mxu0 %v886
      %943 = vmatpush.msra.mxu0 %v885
      %944 = vmatpush.msra.mxu0 %v884
      %945 = vmatpush.msra.mxu0 %v883
      %946 = vmatpush.msra.mxu0 %v882
      %947 = vmatpush.msra.mxu0 %v881
      %948 = vmatpush.msra.mxu0 %v880
      %949 = vmatpush.msra.mxu0 %v879
      %950 = vmatmul.f32.gmra.mxu0 %v850
      %v951 = vpop.f32.mrf.mxu0
      %v952 = vadd.f32 %v929, %v951
      %953 = vmatmul.f32.gmra.mxu0 %v852
      %v954 = vpop.f32.mrf.mxu0
      %v955 = vadd.f32 %v932, %v954
      %956 = vdwg.mxu0
      %957 = vmatpush.msra.mxu0 %v910
      %958 = vmatpush.msra.mxu0 %v909
      %959 = vmatpush.msra.mxu0 %v908
      %960 = vmatpush.msra.mxu0 %v907
      %961 = vmatpush.msra.mxu0 %v906
      %962 = vmatpush.msra.mxu0 %v905
      %963 = vmatpush.msra.mxu0 %v904
      %964 = vmatpush.msra.mxu0 %v903
      %965 = vmatpush.msra.mxu0 %v902
      %966 = vmatpush.msra.mxu0 %v901
      %967 = vmatpush.msra.mxu0 %v900
      %968 = vmatpush.msra.mxu0 %v899
      %969 = vmatpush.msra.mxu0 %v898
      %970 = vmatpush.msra.mxu0 %v897
      %971 = vmatpush.msra.mxu0 %v896
      %972 = vmatpush.msra.mxu0 %v895
      %973 = vmatmul.f32.gmra.mxu0 %v857
      %v974 = vpop.f32.mrf.mxu0
      %v975 = vadd.f32 %v952, %v974
      %976 = vmatmul.f32.gmra.mxu0 %v859
      %v977 = vpop.f32.mrf.mxu0
      %v978 = vadd.f32 %v955, %v977
      %979 = vdwg.mxu0
      %v980 = vperm.slane %v200, 5
      %v981 = vmul.f32 %v975, %v980
      %v982 = vmul.f32 %v978, %v980
      %v983 = vperm.slane %v202, 5
      %v984 = vadd.f32 %v981, %v983
      %v985 = vadd.f32 %v982, %v983
      %v986 = vmax.f32 %v984, 0.0
      %v987 = vmax.f32 %v985, 0.0
      %v990 = vrot.slane %v986, 7
      %v991 = vrot.slane %v987, 7
      %v992 = vsel %vm214, %v990, %v991
      %v996 = vsel %vm214, 0.0, %v990
      %v997 = vsel %vm214, %v991, 0.0
      %v1000 = vrot.slane %v996, 1
      %v1001 = vrot.slane %v992, 1
      %v1002 = vsel %vm225, %v1000, %v1001
      %v1003 = vrot.slane %v997, 1
      %v1004 = vsel %vm225, %v1001, %v1003
      %v1007 = vrot.slane %v996, 2
      %v1008 = vrot.slane %v992, 2
      %v1009 = vsel %vm233, %v1007, %v1008
      %v1010 = vrot.slane %v997, 2
      %v1011 = vsel %vm233, %v1008, %v1010
      %s1014 = scalar_lea.vmem %s1, 1920
      %v1015 = vld [vmem:[%s1014] sm:$0xff]
      %v1016 = vld [vmem:[%s1014 + $0x8] sm:$0xff]
      %v1017 = vld [vmem:[%s1014 + $0x10] sm:$0xff]
      %v1018 = vld [vmem:[%s1014 + $0x18] sm:$0xff]
      %v1019 = vld [vmem:[%s1014 + $0x20] sm:$0xff]
      %v1020 = vld [vmem:[%s1014 + $0x28] sm:$0xff]
      %v1021 = vld [vmem:[%s1014 + $0x30] sm:$0xff]
      %v1022 = vld [vmem:[%s1014 + $0x38] sm:$0xff]
      %v1023 = vld [vmem:[%s1014 + $0x40] sm:$0xff]
      %v1024 = vld [vmem:[%s1014 + $0x48] sm:$0xff]
      %v1025 = vld [vmem:[%s1014 + $0x50] sm:$0xff]
      %v1026 = vld [vmem:[%s1014 + $0x58] sm:$0xff]
      %v1027 = vld [vmem:[%s1014 + $0x60] sm:$0xff]
      %v1028 = vld [vmem:[%s1014 + $0x68] sm:$0xff]
      %v1029 = vld [vmem:[%s1014 + $0x70] sm:$0xff]
      %v1030 = vld [vmem:[%s1014 + $0x78] sm:$0xff]
      %v1031 = vld [vmem:[%s1014 + $0x80] sm:$0xff]
      %v1032 = vld [vmem:[%s1014 + $0x88] sm:$0xff]
      %v1033 = vld [vmem:[%s1014 + $0x90] sm:$0xff]
      %v1034 = vld [vmem:[%s1014 + $0x98] sm:$0xff]
      %v1035 = vld [vmem:[%s1014 + $0xa0] sm:$0xff]
      %v1036 = vld [vmem:[%s1014 + $0xa8] sm:$0xff]
      %v1037 = vld [vmem:[%s1014 + $0xb0] sm:$0xff]
      %v1038 = vld [vmem:[%s1014 + $0xb8] sm:$0xff]
      %v1039 = vld [vmem:[%s1014 + $0xc0] sm:$0xff]
      %v1040 = vld [vmem:[%s1014 + $0xc8] sm:$0xff]
      %v1041 = vld [vmem:[%s1014 + $0xd0] sm:$0xff]
      %v1042 = vld [vmem:[%s1014 + $0xd8] sm:$0xff]
      %v1043 = vld [vmem:[%s1014 + $0xe0] sm:$0xff]
      %v1044 = vld [vmem:[%s1014 + $0xe8] sm:$0xff]
      %v1045 = vld [vmem:[%s1014 + $0xf0] sm:$0xff]
      %v1046 = vld [vmem:[%s1014 + $0xf8] sm:$0xff]
      %v1047 = vld [vmem:[%s1014 + $0x100] sm:$0xff]
      %v1048 = vld [vmem:[%s1014 + $0x108] sm:$0xff]
      %v1049 = vld [vmem:[%s1014 + $0x110] sm:$0xff]
      %v1050 = vld [vmem:[%s1014 + $0x118] sm:$0xff]
      %v1051 = vld [vmem:[%s1014 + $0x120] sm:$0xff]
      %v1052 = vld [vmem:[%s1014 + $0x128] sm:$0xff]
      %v1053 = vld [vmem:[%s1014 + $0x130] sm:$0xff]
      %v1054 = vld [vmem:[%s1014 + $0x138] sm:$0xff]
      %v1055 = vld [vmem:[%s1014 + $0x140] sm:$0xff]
      %v1056 = vld [vmem:[%s1014 + $0x148] sm:$0xff]
      %v1057 = vld [vmem:[%s1014 + $0x150] sm:$0xff]
      %v1058 = vld [vmem:[%s1014 + $0x158] sm:$0xff]
      %v1059 = vld [vmem:[%s1014 + $0x160] sm:$0xff]
      %v1060 = vld [vmem:[%s1014 + $0x168] sm:$0xff]
      %v1061 = vld [vmem:[%s1014 + $0x170] sm:$0xff]
      %v1062 = vld [vmem:[%s1014 + $0x178] sm:$0xff]
      %1063 = vmatpush.msra.mxu0 %v1030
      %1064 = vmatpush.msra.mxu0 %v1029
      %1065 = vmatpush.msra.mxu0 %v1028
      %1066 = vmatpush.msra.mxu0 %v1027
      %1067 = vmatpush.msra.mxu0 %v1026
      %1068 = vmatpush.msra.mxu0 %v1025
      %1069 = vmatpush.msra.mxu0 %v1024
      %1070 = vmatpush.msra.mxu0 %v1023
      %1071 = vmatpush.msra.mxu0 %v1022
      %1072 = vmatpush.msra.mxu0 %v1021
      %1073 = vmatpush.msra.mxu0 %v1020
      %1074 = vmatpush.msra.mxu0 %v1019
      %1075 = vmatpush.msra.mxu0 %v1018
      %1076 = vmatpush.msra.mxu0 %v1017
      %1077 = vmatpush.msra.mxu0 %v1016
      %1078 = vmatpush.msra.mxu0 %v1015
      %1079 = vmatmul.f32.gmra.mxu0 %v996
      %v1080 = vpop.f32.mrf.mxu0
      %v1081 = vadd.f32 0.0, %v1080
      %1082 = vmatmul.f32.gmra.mxu0 %v992
      %v1083 = vpop.f32.mrf.mxu0
      %v1084 = vadd.f32 0.0, %v1083
      %1085 = vdwg.mxu0
      %1086 = vmatpush.msra.mxu0 %v1046
      %1087 = vmatpush.msra.mxu0 %v1045
      %1088 = vmatpush.msra.mxu0 %v1044
      %1089 = vmatpush.msra.mxu0 %v1043
      %1090 = vmatpush.msra.mxu0 %v1042
      %1091 = vmatpush.msra.mxu0 %v1041
      %1092 = vmatpush.msra.mxu0 %v1040
      %1093 = vmatpush.msra.mxu0 %v1039
      %1094 = vmatpush.msra.mxu0 %v1038
      %1095 = vmatpush.msra.mxu0 %v1037
      %1096 = vmatpush.msra.mxu0 %v1036
      %1097 = vmatpush.msra.mxu0 %v1035
      %1098 = vmatpush.msra.mxu0 %v1034
      %1099 = vmatpush.msra.mxu0 %v1033
      %1100 = vmatpush.msra.mxu0 %v1032
      %1101 = vmatpush.msra.mxu0 %v1031
      %1102 = vmatmul.f32.gmra.mxu0 %v1002
      %v1103 = vpop.f32.mrf.mxu0
      %v1104 = vadd.f32 %v1081, %v1103
      %1105 = vmatmul.f32.gmra.mxu0 %v1004
      %v1106 = vpop.f32.mrf.mxu0
      %v1107 = vadd.f32 %v1084, %v1106
      %1108 = vdwg.mxu0
      %1109 = vmatpush.msra.mxu0 %v1062
      %1110 = vmatpush.msra.mxu0 %v1061
      %1111 = vmatpush.msra.mxu0 %v1060
      %1112 = vmatpush.msra.mxu0 %v1059
      %1113 = vmatpush.msra.mxu0 %v1058
      %1114 = vmatpush.msra.mxu0 %v1057
      %1115 = vmatpush.msra.mxu0 %v1056
      %1116 = vmatpush.msra.mxu0 %v1055
      %1117 = vmatpush.msra.mxu0 %v1054
      %1118 = vmatpush.msra.mxu0 %v1053
      %1119 = vmatpush.msra.mxu0 %v1052
      %1120 = vmatpush.msra.mxu0 %v1051
      %1121 = vmatpush.msra.mxu0 %v1050
      %1122 = vmatpush.msra.mxu0 %v1049
      %1123 = vmatpush.msra.mxu0 %v1048
      %1124 = vmatpush.msra.mxu0 %v1047
      %1125 = vmatmul.f32.gmra.mxu0 %v1009
      %v1126 = vpop.f32.mrf.mxu0
      %v1127 = vadd.f32 %v1104, %v1126
      %1128 = vmatmul.f32.gmra.mxu0 %v1011
      %v1129 = vpop.f32.mrf.mxu0
      %v1130 = vadd.f32 %v1107, %v1129
      %1131 = vdwg.mxu0
      %v1132 = vmul.f32 %v813, 12.0
      %v1133 = vmul.f32 %v816, 12.0
      %v1134 = vsub.f32 %v505, %v1132
      %v1135 = vsub.f32 %v508, %v1133
      %v1136 = vmul.f32 %v1127, 15.0
      %v1137 = vmul.f32 %v1130, 15.0
      %v1138 = vadd.f32 %v1134, %v1136
      %v1139 = vadd.f32 %v1135, %v1137
      %v1140 = vmul.f32 %v1138, 0.25
      %v1141 = vmul.f32 %v1139, 0.25
      %v1142 = vadd.f32 %v1140, %v198
      %v1143 = vadd.f32 %v1141, %v199
      %v1144 = vperm.slane %v200, 6
      %v1145 = vmul.f32 %v1142, %v1144
      %v1146 = vmul.f32 %v1143, %v1144
      %v1147 = vperm.slane %v202, 6
      %v1148 = vadd.f32 %v1145, %v1147
      %v1149 = vadd.f32 %v1146, %v1147
      %v1150 = vmax.f32 %v1148, 0.0
      %v1151 = vmax.f32 %v1149, 0.0
      %v1154 = vrot.slane %v1150, 7
      %v1155 = vrot.slane %v1151, 7
      %v1156 = vsel %vm214, %v1154, %v1155
      %v1160 = vsel %vm214, 0.0, %v1154
      %v1161 = vsel %vm214, %v1155, 0.0
      %v1164 = vrot.slane %v1160, 1
      %v1165 = vrot.slane %v1156, 1
      %v1166 = vsel %vm225, %v1164, %v1165
      %v1167 = vrot.slane %v1161, 1
      %v1168 = vsel %vm225, %v1165, %v1167
      %v1171 = vrot.slane %v1160, 2
      %v1172 = vrot.slane %v1156, 2
      %v1173 = vsel %vm233, %v1171, %v1172
      %v1174 = vrot.slane %v1161, 2
      %v1175 = vsel %vm233, %v1172, %v1174
      %s1178 = scalar_lea.vmem %s1, 2304
      %v1179 = vld [vmem:[%s1178] sm:$0xff]
      %v1180 = vld [vmem:[%s1178 + $0x8] sm:$0xff]
      %v1181 = vld [vmem:[%s1178 + $0x10] sm:$0xff]
      %v1182 = vld [vmem:[%s1178 + $0x18] sm:$0xff]
      %v1183 = vld [vmem:[%s1178 + $0x20] sm:$0xff]
      %v1184 = vld [vmem:[%s1178 + $0x28] sm:$0xff]
      %v1185 = vld [vmem:[%s1178 + $0x30] sm:$0xff]
      %v1186 = vld [vmem:[%s1178 + $0x38] sm:$0xff]
      %v1187 = vld [vmem:[%s1178 + $0x40] sm:$0xff]
      %v1188 = vld [vmem:[%s1178 + $0x48] sm:$0xff]
      %v1189 = vld [vmem:[%s1178 + $0x50] sm:$0xff]
      %v1190 = vld [vmem:[%s1178 + $0x58] sm:$0xff]
      %v1191 = vld [vmem:[%s1178 + $0x60] sm:$0xff]
      %v1192 = vld [vmem:[%s1178 + $0x68] sm:$0xff]
      %v1193 = vld [vmem:[%s1178 + $0x70] sm:$0xff]
      %v1194 = vld [vmem:[%s1178 + $0x78] sm:$0xff]
      %v1195 = vld [vmem:[%s1178 + $0x80] sm:$0xff]
      %v1196 = vld [vmem:[%s1178 + $0x88] sm:$0xff]
      %v1197 = vld [vmem:[%s1178 + $0x90] sm:$0xff]
      %v1198 = vld [vmem:[%s1178 + $0x98] sm:$0xff]
      %v1199 = vld [vmem:[%s1178 + $0xa0] sm:$0xff]
      %v1200 = vld [vmem:[%s1178 + $0xa8] sm:$0xff]
      %v1201 = vld [vmem:[%s1178 + $0xb0] sm:$0xff]
      %v1202 = vld [vmem:[%s1178 + $0xb8] sm:$0xff]
      %v1203 = vld [vmem:[%s1178 + $0xc0] sm:$0xff]
      %v1204 = vld [vmem:[%s1178 + $0xc8] sm:$0xff]
      %v1205 = vld [vmem:[%s1178 + $0xd0] sm:$0xff]
      %v1206 = vld [vmem:[%s1178 + $0xd8] sm:$0xff]
      %v1207 = vld [vmem:[%s1178 + $0xe0] sm:$0xff]
      %v1208 = vld [vmem:[%s1178 + $0xe8] sm:$0xff]
      %v1209 = vld [vmem:[%s1178 + $0xf0] sm:$0xff]
      %v1210 = vld [vmem:[%s1178 + $0xf8] sm:$0xff]
      %v1211 = vld [vmem:[%s1178 + $0x100] sm:$0xff]
      %v1212 = vld [vmem:[%s1178 + $0x108] sm:$0xff]
      %v1213 = vld [vmem:[%s1178 + $0x110] sm:$0xff]
      %v1214 = vld [vmem:[%s1178 + $0x118] sm:$0xff]
      %v1215 = vld [vmem:[%s1178 + $0x120] sm:$0xff]
      %v1216 = vld [vmem:[%s1178 + $0x128] sm:$0xff]
      %v1217 = vld [vmem:[%s1178 + $0x130] sm:$0xff]
      %v1218 = vld [vmem:[%s1178 + $0x138] sm:$0xff]
      %v1219 = vld [vmem:[%s1178 + $0x140] sm:$0xff]
      %v1220 = vld [vmem:[%s1178 + $0x148] sm:$0xff]
      %v1221 = vld [vmem:[%s1178 + $0x150] sm:$0xff]
      %v1222 = vld [vmem:[%s1178 + $0x158] sm:$0xff]
      %v1223 = vld [vmem:[%s1178 + $0x160] sm:$0xff]
      %v1224 = vld [vmem:[%s1178 + $0x168] sm:$0xff]
      %v1225 = vld [vmem:[%s1178 + $0x170] sm:$0xff]
      %v1226 = vld [vmem:[%s1178 + $0x178] sm:$0xff]
      %1227 = vmatpush.msra.mxu0 %v1194
      %1228 = vmatpush.msra.mxu0 %v1193
      %1229 = vmatpush.msra.mxu0 %v1192
      %1230 = vmatpush.msra.mxu0 %v1191
      %1231 = vmatpush.msra.mxu0 %v1190
      %1232 = vmatpush.msra.mxu0 %v1189
      %1233 = vmatpush.msra.mxu0 %v1188
      %1234 = vmatpush.msra.mxu0 %v1187
      %1235 = vmatpush.msra.mxu0 %v1186
      %1236 = vmatpush.msra.mxu0 %v1185
      %1237 = vmatpush.msra.mxu0 %v1184
      %1238 = vmatpush.msra.mxu0 %v1183
      %1239 = vmatpush.msra.mxu0 %v1182
      %1240 = vmatpush.msra.mxu0 %v1181
      %1241 = vmatpush.msra.mxu0 %v1180
      %1242 = vmatpush.msra.mxu0 %v1179
      %1243 = vmatmul.f32.gmra.mxu0 %v1160
      %v1244 = vpop.f32.mrf.mxu0
      %v1245 = vadd.f32 0.0, %v1244
      %1246 = vmatmul.f32.gmra.mxu0 %v1156
      %v1247 = vpop.f32.mrf.mxu0
      %v1248 = vadd.f32 0.0, %v1247
      %1249 = vdwg.mxu0
      %1250 = vmatpush.msra.mxu0 %v1210
      %1251 = vmatpush.msra.mxu0 %v1209
      %1252 = vmatpush.msra.mxu0 %v1208
      %1253 = vmatpush.msra.mxu0 %v1207
      %1254 = vmatpush.msra.mxu0 %v1206
      %1255 = vmatpush.msra.mxu0 %v1205
      %1256 = vmatpush.msra.mxu0 %v1204
      %1257 = vmatpush.msra.mxu0 %v1203
      %1258 = vmatpush.msra.mxu0 %v1202
      %1259 = vmatpush.msra.mxu0 %v1201
      %1260 = vmatpush.msra.mxu0 %v1200
      %1261 = vmatpush.msra.mxu0 %v1199
      %1262 = vmatpush.msra.mxu0 %v1198
      %1263 = vmatpush.msra.mxu0 %v1197
      %1264 = vmatpush.msra.mxu0 %v1196
      %1265 = vmatpush.msra.mxu0 %v1195
      %1266 = vmatmul.f32.gmra.mxu0 %v1166
      %v1267 = vpop.f32.mrf.mxu0
      %v1268 = vadd.f32 %v1245, %v1267
      %1269 = vmatmul.f32.gmra.mxu0 %v1168
      %v1270 = vpop.f32.mrf.mxu0
      %v1271 = vadd.f32 %v1248, %v1270
      %1272 = vdwg.mxu0
      %1273 = vmatpush.msra.mxu0 %v1226
      %1274 = vmatpush.msra.mxu0 %v1225
      %1275 = vmatpush.msra.mxu0 %v1224
      %1276 = vmatpush.msra.mxu0 %v1223
      %1277 = vmatpush.msra.mxu0 %v1222
      %1278 = vmatpush.msra.mxu0 %v1221
      %1279 = vmatpush.msra.mxu0 %v1220
      %1280 = vmatpush.msra.mxu0 %v1219
      %1281 = vmatpush.msra.mxu0 %v1218
      %1282 = vmatpush.msra.mxu0 %v1217
      %1283 = vmatpush.msra.mxu0 %v1216
      %1284 = vmatpush.msra.mxu0 %v1215
      %1285 = vmatpush.msra.mxu0 %v1214
      %1286 = vmatpush.msra.mxu0 %v1213
      %1287 = vmatpush.msra.mxu0 %v1212
      %1288 = vmatpush.msra.mxu0 %v1211
      %1289 = vmatmul.f32.gmra.mxu0 %v1173
      %v1290 = vpop.f32.mrf.mxu0
      %v1291 = vadd.f32 %v1268, %v1290
      %1292 = vmatmul.f32.gmra.mxu0 %v1175
      %v1293 = vpop.f32.mrf.mxu0
      %v1294 = vadd.f32 %v1271, %v1293
      %1295 = vdwg.mxu0
      %v1296 = vperm.slane %v200, 7
      %v1297 = vmul.f32 %v1291, %v1296
      %v1298 = vmul.f32 %v1294, %v1296
      %v1299 = vperm.slane %v202, 7
      %v1300 = vadd.f32 %v1297, %v1299
      %v1301 = vadd.f32 %v1298, %v1299
      %v1302 = vmax.f32 %v1300, 0.0
      %v1303 = vmax.f32 %v1301, 0.0
      %v1306 = vrot.slane %v1302, 7
      %v1307 = vrot.slane %v1303, 7
      %v1308 = vsel %vm214, %v1306, %v1307
      %v1312 = vsel %vm214, 0.0, %v1306
      %v1313 = vsel %vm214, %v1307, 0.0
      %v1316 = vrot.slane %v1312, 1
      %v1317 = vrot.slane %v1308, 1
      %v1318 = vsel %vm225, %v1316, %v1317
      %v1319 = vrot.slane %v1313, 1
      %v1320 = vsel %vm225, %v1317, %v1319
      %v1323 = vrot.slane %v1312, 2
      %v1324 = vrot.slane %v1308, 2
      %v1325 = vsel %vm233, %v1323, %v1324
      %v1326 = vrot.slane %v1313, 2
      %v1327 = vsel %vm233, %v1324, %v1326
      %s1330 = scalar_lea.vmem %s1, 2688
      %v1331 = vld [vmem:[%s1330] sm:$0xff]
      %v1332 = vld [vmem:[%s1330 + $0x8] sm:$0xff]
      %v1333 = vld [vmem:[%s1330 + $0x10] sm:$0xff]
      %v1334 = vld [vmem:[%s1330 + $0x18] sm:$0xff]
      %v1335 = vld [vmem:[%s1330 + $0x20] sm:$0xff]
      %v1336 = vld [vmem:[%s1330 + $0x28] sm:$0xff]
      %v1337 = vld [vmem:[%s1330 + $0x30] sm:$0xff]
      %v1338 = vld [vmem:[%s1330 + $0x38] sm:$0xff]
      %v1339 = vld [vmem:[%s1330 + $0x40] sm:$0xff]
      %v1340 = vld [vmem:[%s1330 + $0x48] sm:$0xff]
      %v1341 = vld [vmem:[%s1330 + $0x50] sm:$0xff]
      %v1342 = vld [vmem:[%s1330 + $0x58] sm:$0xff]
      %v1343 = vld [vmem:[%s1330 + $0x60] sm:$0xff]
      %v1344 = vld [vmem:[%s1330 + $0x68] sm:$0xff]
      %v1345 = vld [vmem:[%s1330 + $0x70] sm:$0xff]
      %v1346 = vld [vmem:[%s1330 + $0x78] sm:$0xff]
      %v1347 = vld [vmem:[%s1330 + $0x80] sm:$0xff]
      %v1348 = vld [vmem:[%s1330 + $0x88] sm:$0xff]
      %v1349 = vld [vmem:[%s1330 + $0x90] sm:$0xff]
      %v1350 = vld [vmem:[%s1330 + $0x98] sm:$0xff]
      %v1351 = vld [vmem:[%s1330 + $0xa0] sm:$0xff]
      %v1352 = vld [vmem:[%s1330 + $0xa8] sm:$0xff]
      %v1353 = vld [vmem:[%s1330 + $0xb0] sm:$0xff]
      %v1354 = vld [vmem:[%s1330 + $0xb8] sm:$0xff]
      %v1355 = vld [vmem:[%s1330 + $0xc0] sm:$0xff]
      %v1356 = vld [vmem:[%s1330 + $0xc8] sm:$0xff]
      %v1357 = vld [vmem:[%s1330 + $0xd0] sm:$0xff]
      %v1358 = vld [vmem:[%s1330 + $0xd8] sm:$0xff]
      %v1359 = vld [vmem:[%s1330 + $0xe0] sm:$0xff]
      %v1360 = vld [vmem:[%s1330 + $0xe8] sm:$0xff]
      %v1361 = vld [vmem:[%s1330 + $0xf0] sm:$0xff]
      %v1362 = vld [vmem:[%s1330 + $0xf8] sm:$0xff]
      %v1363 = vld [vmem:[%s1330 + $0x100] sm:$0xff]
      %v1364 = vld [vmem:[%s1330 + $0x108] sm:$0xff]
      %v1365 = vld [vmem:[%s1330 + $0x110] sm:$0xff]
      %v1366 = vld [vmem:[%s1330 + $0x118] sm:$0xff]
      %v1367 = vld [vmem:[%s1330 + $0x120] sm:$0xff]
      %v1368 = vld [vmem:[%s1330 + $0x128] sm:$0xff]
      %v1369 = vld [vmem:[%s1330 + $0x130] sm:$0xff]
      %v1370 = vld [vmem:[%s1330 + $0x138] sm:$0xff]
      %v1371 = vld [vmem:[%s1330 + $0x140] sm:$0xff]
      %v1372 = vld [vmem:[%s1330 + $0x148] sm:$0xff]
      %v1373 = vld [vmem:[%s1330 + $0x150] sm:$0xff]
      %v1374 = vld [vmem:[%s1330 + $0x158] sm:$0xff]
      %v1375 = vld [vmem:[%s1330 + $0x160] sm:$0xff]
      %v1376 = vld [vmem:[%s1330 + $0x168] sm:$0xff]
      %v1377 = vld [vmem:[%s1330 + $0x170] sm:$0xff]
      %v1378 = vld [vmem:[%s1330 + $0x178] sm:$0xff]
      %1379 = vmatpush.msra.mxu0 %v1346
      %1380 = vmatpush.msra.mxu0 %v1345
      %1381 = vmatpush.msra.mxu0 %v1344
      %1382 = vmatpush.msra.mxu0 %v1343
      %1383 = vmatpush.msra.mxu0 %v1342
      %1384 = vmatpush.msra.mxu0 %v1341
      %1385 = vmatpush.msra.mxu0 %v1340
      %1386 = vmatpush.msra.mxu0 %v1339
      %1387 = vmatpush.msra.mxu0 %v1338
      %1388 = vmatpush.msra.mxu0 %v1337
      %1389 = vmatpush.msra.mxu0 %v1336
      %1390 = vmatpush.msra.mxu0 %v1335
      %1391 = vmatpush.msra.mxu0 %v1334
      %1392 = vmatpush.msra.mxu0 %v1333
      %1393 = vmatpush.msra.mxu0 %v1332
      %1394 = vmatpush.msra.mxu0 %v1331
      %1395 = vmatmul.f32.gmra.mxu0 %v1312
      %v1396 = vpop.f32.mrf.mxu0
      %v1397 = vadd.f32 0.0, %v1396
      %1398 = vmatmul.f32.gmra.mxu0 %v1308
      %v1399 = vpop.f32.mrf.mxu0
      %v1400 = vadd.f32 0.0, %v1399
      %1401 = vdwg.mxu0
      %1402 = vmatpush.msra.mxu0 %v1362
      %1403 = vmatpush.msra.mxu0 %v1361
      %1404 = vmatpush.msra.mxu0 %v1360
      %1405 = vmatpush.msra.mxu0 %v1359
      %1406 = vmatpush.msra.mxu0 %v1358
      %1407 = vmatpush.msra.mxu0 %v1357
      %1408 = vmatpush.msra.mxu0 %v1356
      %1409 = vmatpush.msra.mxu0 %v1355
      %1410 = vmatpush.msra.mxu0 %v1354
      %1411 = vmatpush.msra.mxu0 %v1353
      %1412 = vmatpush.msra.mxu0 %v1352
      %1413 = vmatpush.msra.mxu0 %v1351
      %1414 = vmatpush.msra.mxu0 %v1350
      %1415 = vmatpush.msra.mxu0 %v1349
      %1416 = vmatpush.msra.mxu0 %v1348
      %1417 = vmatpush.msra.mxu0 %v1347
      %1418 = vmatmul.f32.gmra.mxu0 %v1318
      %v1419 = vpop.f32.mrf.mxu0
      %v1420 = vadd.f32 %v1397, %v1419
      %1421 = vmatmul.f32.gmra.mxu0 %v1320
      %v1422 = vpop.f32.mrf.mxu0
      %v1423 = vadd.f32 %v1400, %v1422
      %1424 = vdwg.mxu0
      %1425 = vmatpush.msra.mxu0 %v1378
      %1426 = vmatpush.msra.mxu0 %v1377
      %1427 = vmatpush.msra.mxu0 %v1376
      %1428 = vmatpush.msra.mxu0 %v1375
      %1429 = vmatpush.msra.mxu0 %v1374
      %1430 = vmatpush.msra.mxu0 %v1373
      %1431 = vmatpush.msra.mxu0 %v1372
      %1432 = vmatpush.msra.mxu0 %v1371
      %1433 = vmatpush.msra.mxu0 %v1370
      %1434 = vmatpush.msra.mxu0 %v1369
      %1435 = vmatpush.msra.mxu0 %v1368
      %1436 = vmatpush.msra.mxu0 %v1367
      %1437 = vmatpush.msra.mxu0 %v1366
      %1438 = vmatpush.msra.mxu0 %v1365
      %1439 = vmatpush.msra.mxu0 %v1364
      %1440 = vmatpush.msra.mxu0 %v1363
      %1441 = vmatmul.f32.gmra.mxu0 %v1325
      %v1442 = vpop.f32.mrf.mxu0
      %v1443 = vadd.f32 %v1420, %v1442
      %1444 = vmatmul.f32.gmra.mxu0 %v1327
      %v1445 = vpop.f32.mrf.mxu0
      %v1446 = vadd.f32 %v1423, %v1445
      %1447 = vdwg.mxu0
      %v1448 = vmul.f32 %v505, 6.0
      %v1449 = vmul.f32 %v508, 6.0
      %v1450 = vmul.f32 %v813, 90.0
      %v1451 = vmul.f32 %v816, 90.0
      %v1452 = vadd.f32 %v1448, %v1450
      %v1453 = vadd.f32 %v1449, %v1451
      %v1454 = vmul.f32 %v1127, 50.0
      %v1455 = vmul.f32 %v1130, 50.0
      %v1456 = vsub.f32 %v1452, %v1454
      %v1457 = vsub.f32 %v1453, %v1455
      %v1458 = vmul.f32 %v1443, 8.0
      %v1459 = vmul.f32 %v1446, 8.0
      %v1460 = vadd.f32 %v1456, %v1458
      %v1461 = vadd.f32 %v1457, %v1459
      %v1462 = vmul.f32 %v1460, 0.012345679
      %v1463 = vmul.f32 %v1461, 0.012345679
      %v1464 = vadd.f32 %v1462, %v198
      %v1465 = vadd.f32 %v1463, %v199
      %v1466 = vperm.slane %v201, 0
      %v1467 = vmul.f32 %v1464, %v1466
      %v1468 = vmul.f32 %v1465, %v1466
      %v1469 = vperm.slane %v203, 0
      %v1470 = vadd.f32 %v1467, %v1469
      %v1471 = vadd.f32 %v1468, %v1469
      %v1472 = vmax.f32 %v1470, 0.0
      %v1473 = vmax.f32 %v1471, 0.0
      %v1476 = vrot.slane %v1472, 7
      %v1477 = vrot.slane %v1473, 7
      %v1478 = vsel %vm214, %v1476, %v1477
      %v1482 = vsel %vm214, 0.0, %v1476
      %v1483 = vsel %vm214, %v1477, 0.0
      %v1486 = vrot.slane %v1482, 1
      %v1487 = vrot.slane %v1478, 1
      %v1488 = vsel %vm225, %v1486, %v1487
      %v1489 = vrot.slane %v1483, 1
      %v1490 = vsel %vm225, %v1487, %v1489
      %v1493 = vrot.slane %v1482, 2
      %v1494 = vrot.slane %v1478, 2
      %v1495 = vsel %vm233, %v1493, %v1494
      %v1496 = vrot.slane %v1483, 2
      %v1497 = vsel %vm233, %v1494, %v1496
      %s1500 = scalar_lea.vmem %s1, 3072
      %v1501 = vld [vmem:[%s1500] sm:$0xff]
      %v1502 = vld [vmem:[%s1500 + $0x8] sm:$0xff]
      %v1503 = vld [vmem:[%s1500 + $0x10] sm:$0xff]
      %v1504 = vld [vmem:[%s1500 + $0x18] sm:$0xff]
      %v1505 = vld [vmem:[%s1500 + $0x20] sm:$0xff]
      %v1506 = vld [vmem:[%s1500 + $0x28] sm:$0xff]
      %v1507 = vld [vmem:[%s1500 + $0x30] sm:$0xff]
      %v1508 = vld [vmem:[%s1500 + $0x38] sm:$0xff]
      %v1509 = vld [vmem:[%s1500 + $0x40] sm:$0xff]
      %v1510 = vld [vmem:[%s1500 + $0x48] sm:$0xff]
      %v1511 = vld [vmem:[%s1500 + $0x50] sm:$0xff]
      %v1512 = vld [vmem:[%s1500 + $0x58] sm:$0xff]
      %v1513 = vld [vmem:[%s1500 + $0x60] sm:$0xff]
      %v1514 = vld [vmem:[%s1500 + $0x68] sm:$0xff]
      %v1515 = vld [vmem:[%s1500 + $0x70] sm:$0xff]
      %v1516 = vld [vmem:[%s1500 + $0x78] sm:$0xff]
      %v1517 = vld [vmem:[%s1500 + $0x80] sm:$0xff]
      %v1518 = vld [vmem:[%s1500 + $0x88] sm:$0xff]
      %v1519 = vld [vmem:[%s1500 + $0x90] sm:$0xff]
      %v1520 = vld [vmem:[%s1500 + $0x98] sm:$0xff]
      %v1521 = vld [vmem:[%s1500 + $0xa0] sm:$0xff]
      %v1522 = vld [vmem:[%s1500 + $0xa8] sm:$0xff]
      %v1523 = vld [vmem:[%s1500 + $0xb0] sm:$0xff]
      %v1524 = vld [vmem:[%s1500 + $0xb8] sm:$0xff]
      %v1525 = vld [vmem:[%s1500 + $0xc0] sm:$0xff]
      %v1526 = vld [vmem:[%s1500 + $0xc8] sm:$0xff]
      %v1527 = vld [vmem:[%s1500 + $0xd0] sm:$0xff]
      %v1528 = vld [vmem:[%s1500 + $0xd8] sm:$0xff]
      %v1529 = vld [vmem:[%s1500 + $0xe0] sm:$0xff]
      %v1530 = vld [vmem:[%s1500 + $0xe8] sm:$0xff]
      %v1531 = vld [vmem:[%s1500 + $0xf0] sm:$0xff]
      %v1532 = vld [vmem:[%s1500 + $0xf8] sm:$0xff]
      %v1533 = vld [vmem:[%s1500 + $0x100] sm:$0xff]
      %v1534 = vld [vmem:[%s1500 + $0x108] sm:$0xff]
      %v1535 = vld [vmem:[%s1500 + $0x110] sm:$0xff]
      %v1536 = vld [vmem:[%s1500 + $0x118] sm:$0xff]
      %v1537 = vld [vmem:[%s1500 + $0x120] sm:$0xff]
      %v1538 = vld [vmem:[%s1500 + $0x128] sm:$0xff]
      %v1539 = vld [vmem:[%s1500 + $0x130] sm:$0xff]
      %v1540 = vld [vmem:[%s1500 + $0x138] sm:$0xff]
      %v1541 = vld [vmem:[%s1500 + $0x140] sm:$0xff]
      %v1542 = vld [vmem:[%s1500 + $0x148] sm:$0xff]
      %v1543 = vld [vmem:[%s1500 + $0x150] sm:$0xff]
      %v1544 = vld [vmem:[%s1500 + $0x158] sm:$0xff]
      %v1545 = vld [vmem:[%s1500 + $0x160] sm:$0xff]
      %v1546 = vld [vmem:[%s1500 + $0x168] sm:$0xff]
      %v1547 = vld [vmem:[%s1500 + $0x170] sm:$0xff]
      %v1548 = vld [vmem:[%s1500 + $0x178] sm:$0xff]
      %1549 = vmatpush.msra.mxu0 %v1516
      %1550 = vmatpush.msra.mxu0 %v1515
      %1551 = vmatpush.msra.mxu0 %v1514
      %1552 = vmatpush.msra.mxu0 %v1513
      %1553 = vmatpush.msra.mxu0 %v1512
      %1554 = vmatpush.msra.mxu0 %v1511
      %1555 = vmatpush.msra.mxu0 %v1510
      %1556 = vmatpush.msra.mxu0 %v1509
      %1557 = vmatpush.msra.mxu0 %v1508
      %1558 = vmatpush.msra.mxu0 %v1507
      %1559 = vmatpush.msra.mxu0 %v1506
      %1560 = vmatpush.msra.mxu0 %v1505
      %1561 = vmatpush.msra.mxu0 %v1504
      %1562 = vmatpush.msra.mxu0 %v1503
      %1563 = vmatpush.msra.mxu0 %v1502
      %1564 = vmatpush.msra.mxu0 %v1501
      %1565 = vmatmul.f32.gmra.mxu0 %v1482
      %v1566 = vpop.f32.mrf.mxu0
      %v1567 = vadd.f32 0.0, %v1566
      %1568 = vmatmul.f32.gmra.mxu0 %v1478
      %v1569 = vpop.f32.mrf.mxu0
      %v1570 = vadd.f32 0.0, %v1569
      %1571 = vdwg.mxu0
      %1572 = vmatpush.msra.mxu0 %v1532
      %1573 = vmatpush.msra.mxu0 %v1531
      %1574 = vmatpush.msra.mxu0 %v1530
      %1575 = vmatpush.msra.mxu0 %v1529
      %1576 = vmatpush.msra.mxu0 %v1528
      %1577 = vmatpush.msra.mxu0 %v1527
      %1578 = vmatpush.msra.mxu0 %v1526
      %1579 = vmatpush.msra.mxu0 %v1525
      %1580 = vmatpush.msra.mxu0 %v1524
      %1581 = vmatpush.msra.mxu0 %v1523
      %1582 = vmatpush.msra.mxu0 %v1522
      %1583 = vmatpush.msra.mxu0 %v1521
      %1584 = vmatpush.msra.mxu0 %v1520
      %1585 = vmatpush.msra.mxu0 %v1519
      %1586 = vmatpush.msra.mxu0 %v1518
      %1587 = vmatpush.msra.mxu0 %v1517
      %1588 = vmatmul.f32.gmra.mxu0 %v1488
      %v1589 = vpop.f32.mrf.mxu0
      %v1590 = vadd.f32 %v1567, %v1589
      %1591 = vmatmul.f32.gmra.mxu0 %v1490
      %v1592 = vpop.f32.mrf.mxu0
      %v1593 = vadd.f32 %v1570, %v1592
      %1594 = vdwg.mxu0
      %1595 = vmatpush.msra.mxu0 %v1548
      %1596 = vmatpush.msra.mxu0 %v1547
      %1597 = vmatpush.msra.mxu0 %v1546
      %1598 = vmatpush.msra.mxu0 %v1545
      %1599 = vmatpush.msra.mxu0 %v1544
      %1600 = vmatpush.msra.mxu0 %v1543
      %1601 = vmatpush.msra.mxu0 %v1542
      %1602 = vmatpush.msra.mxu0 %v1541
      %1603 = vmatpush.msra.mxu0 %v1540
      %1604 = vmatpush.msra.mxu0 %v1539
      %1605 = vmatpush.msra.mxu0 %v1538
      %1606 = vmatpush.msra.mxu0 %v1537
      %1607 = vmatpush.msra.mxu0 %v1536
      %1608 = vmatpush.msra.mxu0 %v1535
      %1609 = vmatpush.msra.mxu0 %v1534
      %1610 = vmatpush.msra.mxu0 %v1533
      %1611 = vmatmul.f32.gmra.mxu0 %v1495
      %v1612 = vpop.f32.mrf.mxu0
      %v1613 = vadd.f32 %v1590, %v1612
      %1614 = vmatmul.f32.gmra.mxu0 %v1497
      %v1615 = vpop.f32.mrf.mxu0
      %v1616 = vadd.f32 %v1593, %v1615
      %1617 = vdwg.mxu0
      %v1618 = vperm.slane %v201, 1
      %v1619 = vmul.f32 %v1613, %v1618
      %v1620 = vmul.f32 %v1616, %v1618
      %v1621 = vperm.slane %v203, 1
      %v1622 = vadd.f32 %v1619, %v1621
      %v1623 = vadd.f32 %v1620, %v1621
      %v1624 = vmax.f32 %v1622, 0.0
      %v1625 = vmax.f32 %v1623, 0.0
      %v1628 = vrot.slane %v1624, 7
      %v1629 = vrot.slane %v1625, 7
      %v1630 = vsel %vm214, %v1628, %v1629
      %v1634 = vsel %vm214, 0.0, %v1628
      %v1635 = vsel %vm214, %v1629, 0.0
      %v1638 = vrot.slane %v1634, 1
      %v1639 = vrot.slane %v1630, 1
      %v1640 = vsel %vm225, %v1638, %v1639
      %v1641 = vrot.slane %v1635, 1
      %v1642 = vsel %vm225, %v1639, %v1641
      %v1645 = vrot.slane %v1634, 2
      %v1646 = vrot.slane %v1630, 2
      %v1647 = vsel %vm233, %v1645, %v1646
      %v1648 = vrot.slane %v1635, 2
      %v1649 = vsel %vm233, %v1646, %v1648
      %s1652 = scalar_lea.vmem %s1, 3456
      %v1653 = vld [vmem:[%s1652] sm:$0xff]
      %v1654 = vld [vmem:[%s1652 + $0x8] sm:$0xff]
      %v1655 = vld [vmem:[%s1652 + $0x10] sm:$0xff]
      %v1656 = vld [vmem:[%s1652 + $0x18] sm:$0xff]
      %v1657 = vld [vmem:[%s1652 + $0x20] sm:$0xff]
      %v1658 = vld [vmem:[%s1652 + $0x28] sm:$0xff]
      %v1659 = vld [vmem:[%s1652 + $0x30] sm:$0xff]
      %v1660 = vld [vmem:[%s1652 + $0x38] sm:$0xff]
      %v1661 = vld [vmem:[%s1652 + $0x40] sm:$0xff]
      %v1662 = vld [vmem:[%s1652 + $0x48] sm:$0xff]
      %v1663 = vld [vmem:[%s1652 + $0x50] sm:$0xff]
      %v1664 = vld [vmem:[%s1652 + $0x58] sm:$0xff]
      %v1665 = vld [vmem:[%s1652 + $0x60] sm:$0xff]
      %v1666 = vld [vmem:[%s1652 + $0x68] sm:$0xff]
      %v1667 = vld [vmem:[%s1652 + $0x70] sm:$0xff]
      %v1668 = vld [vmem:[%s1652 + $0x78] sm:$0xff]
      %v1669 = vld [vmem:[%s1652 + $0x80] sm:$0xff]
      %v1670 = vld [vmem:[%s1652 + $0x88] sm:$0xff]
      %v1671 = vld [vmem:[%s1652 + $0x90] sm:$0xff]
      %v1672 = vld [vmem:[%s1652 + $0x98] sm:$0xff]
      %v1673 = vld [vmem:[%s1652 + $0xa0] sm:$0xff]
      %v1674 = vld [vmem:[%s1652 + $0xa8] sm:$0xff]
      %v1675 = vld [vmem:[%s1652 + $0xb0] sm:$0xff]
      %v1676 = vld [vmem:[%s1652 + $0xb8] sm:$0xff]
      %v1677 = vld [vmem:[%s1652 + $0xc0] sm:$0xff]
      %v1678 = vld [vmem:[%s1652 + $0xc8] sm:$0xff]
      %v1679 = vld [vmem:[%s1652 + $0xd0] sm:$0xff]
      %v1680 = vld [vmem:[%s1652 + $0xd8] sm:$0xff]
      %v1681 = vld [vmem:[%s1652 + $0xe0] sm:$0xff]
      %v1682 = vld [vmem:[%s1652 + $0xe8] sm:$0xff]
      %v1683 = vld [vmem:[%s1652 + $0xf0] sm:$0xff]
      %v1684 = vld [vmem:[%s1652 + $0xf8] sm:$0xff]
      %v1685 = vld [vmem:[%s1652 + $0x100] sm:$0xff]
      %v1686 = vld [vmem:[%s1652 + $0x108] sm:$0xff]
      %v1687 = vld [vmem:[%s1652 + $0x110] sm:$0xff]
      %v1688 = vld [vmem:[%s1652 + $0x118] sm:$0xff]
      %v1689 = vld [vmem:[%s1652 + $0x120] sm:$0xff]
      %v1690 = vld [vmem:[%s1652 + $0x128] sm:$0xff]
      %v1691 = vld [vmem:[%s1652 + $0x130] sm:$0xff]
      %v1692 = vld [vmem:[%s1652 + $0x138] sm:$0xff]
      %v1693 = vld [vmem:[%s1652 + $0x140] sm:$0xff]
      %v1694 = vld [vmem:[%s1652 + $0x148] sm:$0xff]
      %v1695 = vld [vmem:[%s1652 + $0x150] sm:$0xff]
      %v1696 = vld [vmem:[%s1652 + $0x158] sm:$0xff]
      %v1697 = vld [vmem:[%s1652 + $0x160] sm:$0xff]
      %v1698 = vld [vmem:[%s1652 + $0x168] sm:$0xff]
      %v1699 = vld [vmem:[%s1652 + $0x170] sm:$0xff]
      %v1700 = vld [vmem:[%s1652 + $0x178] sm:$0xff]
      %1701 = vmatpush.msra.mxu0 %v1668
      %1702 = vmatpush.msra.mxu0 %v1667
      %1703 = vmatpush.msra.mxu0 %v1666
      %1704 = vmatpush.msra.mxu0 %v1665
      %1705 = vmatpush.msra.mxu0 %v1664
      %1706 = vmatpush.msra.mxu0 %v1663
      %1707 = vmatpush.msra.mxu0 %v1662
      %1708 = vmatpush.msra.mxu0 %v1661
      %1709 = vmatpush.msra.mxu0 %v1660
      %1710 = vmatpush.msra.mxu0 %v1659
      %1711 = vmatpush.msra.mxu0 %v1658
      %1712 = vmatpush.msra.mxu0 %v1657
      %1713 = vmatpush.msra.mxu0 %v1656
      %1714 = vmatpush.msra.mxu0 %v1655
      %1715 = vmatpush.msra.mxu0 %v1654
      %1716 = vmatpush.msra.mxu0 %v1653
      %1717 = vmatmul.f32.gmra.mxu0 %v1634
      %v1718 = vpop.f32.mrf.mxu0
      %v1719 = vadd.f32 0.0, %v1718
      %1720 = vmatmul.f32.gmra.mxu0 %v1630
      %v1721 = vpop.f32.mrf.mxu0
      %v1722 = vadd.f32 0.0, %v1721
      %1723 = vdwg.mxu0
      %1724 = vmatpush.msra.mxu0 %v1684
      %1725 = vmatpush.msra.mxu0 %v1683
      %1726 = vmatpush.msra.mxu0 %v1682
      %1727 = vmatpush.msra.mxu0 %v1681
      %1728 = vmatpush.msra.mxu0 %v1680
      %1729 = vmatpush.msra.mxu0 %v1679
      %1730 = vmatpush.msra.mxu0 %v1678
      %1731 = vmatpush.msra.mxu0 %v1677
      %1732 = vmatpush.msra.mxu0 %v1676
      %1733 = vmatpush.msra.mxu0 %v1675
      %1734 = vmatpush.msra.mxu0 %v1674
      %1735 = vmatpush.msra.mxu0 %v1673
      %1736 = vmatpush.msra.mxu0 %v1672
      %1737 = vmatpush.msra.mxu0 %v1671
      %1738 = vmatpush.msra.mxu0 %v1670
      %1739 = vmatpush.msra.mxu0 %v1669
      %1740 = vmatmul.f32.gmra.mxu0 %v1640
      %v1741 = vpop.f32.mrf.mxu0
      %v1742 = vadd.f32 %v1719, %v1741
      %1743 = vmatmul.f32.gmra.mxu0 %v1642
      %v1744 = vpop.f32.mrf.mxu0
      %v1745 = vadd.f32 %v1722, %v1744
      %1746 = vdwg.mxu0
      %1747 = vmatpush.msra.mxu0 %v1700
      %1748 = vmatpush.msra.mxu0 %v1699
      %1749 = vmatpush.msra.mxu0 %v1698
      %1750 = vmatpush.msra.mxu0 %v1697
      %1751 = vmatpush.msra.mxu0 %v1696
      %1752 = vmatpush.msra.mxu0 %v1695
      %1753 = vmatpush.msra.mxu0 %v1694
      %1754 = vmatpush.msra.mxu0 %v1693
      %1755 = vmatpush.msra.mxu0 %v1692
      %1756 = vmatpush.msra.mxu0 %v1691
      %1757 = vmatpush.msra.mxu0 %v1690
      %1758 = vmatpush.msra.mxu0 %v1689
      %1759 = vmatpush.msra.mxu0 %v1688
      %1760 = vmatpush.msra.mxu0 %v1687
      %1761 = vmatpush.msra.mxu0 %v1686
      %1762 = vmatpush.msra.mxu0 %v1685
      %1763 = vmatmul.f32.gmra.mxu0 %v1647
      %v1764 = vpop.f32.mrf.mxu0
      %v1765 = vadd.f32 %v1742, %v1764
      %1766 = vmatmul.f32.gmra.mxu0 %v1649
      %v1767 = vpop.f32.mrf.mxu0
      %v1768 = vadd.f32 %v1745, %v1767
      %1769 = vdwg.mxu0
      %v1770 = vmul.f32 %v813, 36.0
      %v1771 = vmul.f32 %v816, 36.0
      %v1772 = vadd.f32 %v1448, %v1770
      %v1773 = vadd.f32 %v1449, %v1771
      %v1774 = vmul.f32 %v1127, 10.0
      %v1775 = vmul.f32 %v1130, 10.0
      %v1776 = vadd.f32 %v1772, %v1774
      %v1777 = vadd.f32 %v1773, %v1775
      %v1778 = vadd.f32 %v1776, %v1458
      %v1779 = vadd.f32 %v1777, %v1459
      %v1780 = vmul.f32 %v1778, 0.013333334
      %v1781 = vmul.f32 %v1779, 0.013333334
      %v1782 = vadd.f32 %v1780, %v198
      %v1783 = vadd.f32 %v1781, %v199
      %v1784 = vperm.slane %v201, 2
      %v1785 = vmul.f32 %v1782, %v1784
      %v1786 = vmul.f32 %v1783, %v1784
      %v1787 = vperm.slane %v203, 2
      %v1788 = vadd.f32 %v1785, %v1787
      %v1789 = vadd.f32 %v1786, %v1787
      %v1790 = vmax.f32 %v1788, 0.0
      %v1791 = vmax.f32 %v1789, 0.0
      %v1794 = vrot.slane %v1790, 7
      %v1795 = vrot.slane %v1791, 7
      %v1796 = vsel %vm214, %v1794, %v1795
      %v1800 = vsel %vm214, 0.0, %v1794
      %v1801 = vsel %vm214, %v1795, 0.0
      %v1804 = vrot.slane %v1800, 1
      %v1805 = vrot.slane %v1796, 1
      %v1806 = vsel %vm225, %v1804, %v1805
      %v1807 = vrot.slane %v1801, 1
      %v1808 = vsel %vm225, %v1805, %v1807
      %v1811 = vrot.slane %v1800, 2
      %v1812 = vrot.slane %v1796, 2
      %v1813 = vsel %vm233, %v1811, %v1812
      %v1814 = vrot.slane %v1801, 2
      %v1815 = vsel %vm233, %v1812, %v1814
      %s1818 = scalar_lea.vmem %s1, 3840
      %v1819 = vld [vmem:[%s1818] sm:$0xff]
      %v1820 = vld [vmem:[%s1818 + $0x8] sm:$0xff]
      %v1821 = vld [vmem:[%s1818 + $0x10] sm:$0xff]
      %v1822 = vld [vmem:[%s1818 + $0x18] sm:$0xff]
      %v1823 = vld [vmem:[%s1818 + $0x20] sm:$0xff]
      %v1824 = vld [vmem:[%s1818 + $0x28] sm:$0xff]
      %v1825 = vld [vmem:[%s1818 + $0x30] sm:$0xff]
      %v1826 = vld [vmem:[%s1818 + $0x38] sm:$0xff]
      %v1827 = vld [vmem:[%s1818 + $0x40] sm:$0xff]
      %v1828 = vld [vmem:[%s1818 + $0x48] sm:$0xff]
      %v1829 = vld [vmem:[%s1818 + $0x50] sm:$0xff]
      %v1830 = vld [vmem:[%s1818 + $0x58] sm:$0xff]
      %v1831 = vld [vmem:[%s1818 + $0x60] sm:$0xff]
      %v1832 = vld [vmem:[%s1818 + $0x68] sm:$0xff]
      %v1833 = vld [vmem:[%s1818 + $0x70] sm:$0xff]
      %v1834 = vld [vmem:[%s1818 + $0x78] sm:$0xff]
      %v1835 = vld [vmem:[%s1818 + $0x80] sm:$0xff]
      %v1836 = vld [vmem:[%s1818 + $0x88] sm:$0xff]
      %v1837 = vld [vmem:[%s1818 + $0x90] sm:$0xff]
      %v1838 = vld [vmem:[%s1818 + $0x98] sm:$0xff]
      %v1839 = vld [vmem:[%s1818 + $0xa0] sm:$0xff]
      %v1840 = vld [vmem:[%s1818 + $0xa8] sm:$0xff]
      %v1841 = vld [vmem:[%s1818 + $0xb0] sm:$0xff]
      %v1842 = vld [vmem:[%s1818 + $0xb8] sm:$0xff]
      %v1843 = vld [vmem:[%s1818 + $0xc0] sm:$0xff]
      %v1844 = vld [vmem:[%s1818 + $0xc8] sm:$0xff]
      %v1845 = vld [vmem:[%s1818 + $0xd0] sm:$0xff]
      %v1846 = vld [vmem:[%s1818 + $0xd8] sm:$0xff]
      %v1847 = vld [vmem:[%s1818 + $0xe0] sm:$0xff]
      %v1848 = vld [vmem:[%s1818 + $0xe8] sm:$0xff]
      %v1849 = vld [vmem:[%s1818 + $0xf0] sm:$0xff]
      %v1850 = vld [vmem:[%s1818 + $0xf8] sm:$0xff]
      %v1851 = vld [vmem:[%s1818 + $0x100] sm:$0xff]
      %v1852 = vld [vmem:[%s1818 + $0x108] sm:$0xff]
      %v1853 = vld [vmem:[%s1818 + $0x110] sm:$0xff]
      %v1854 = vld [vmem:[%s1818 + $0x118] sm:$0xff]
      %v1855 = vld [vmem:[%s1818 + $0x120] sm:$0xff]
      %v1856 = vld [vmem:[%s1818 + $0x128] sm:$0xff]
      %v1857 = vld [vmem:[%s1818 + $0x130] sm:$0xff]
      %v1858 = vld [vmem:[%s1818 + $0x138] sm:$0xff]
      %v1859 = vld [vmem:[%s1818 + $0x140] sm:$0xff]
      %v1860 = vld [vmem:[%s1818 + $0x148] sm:$0xff]
      %v1861 = vld [vmem:[%s1818 + $0x150] sm:$0xff]
      %v1862 = vld [vmem:[%s1818 + $0x158] sm:$0xff]
      %v1863 = vld [vmem:[%s1818 + $0x160] sm:$0xff]
      %v1864 = vld [vmem:[%s1818 + $0x168] sm:$0xff]
      %v1865 = vld [vmem:[%s1818 + $0x170] sm:$0xff]
      %v1866 = vld [vmem:[%s1818 + $0x178] sm:$0xff]
      %1867 = vmatpush.msra.mxu0 %v1834
      %1868 = vmatpush.msra.mxu0 %v1833
      %1869 = vmatpush.msra.mxu0 %v1832
      %1870 = vmatpush.msra.mxu0 %v1831
      %1871 = vmatpush.msra.mxu0 %v1830
      %1872 = vmatpush.msra.mxu0 %v1829
      %1873 = vmatpush.msra.mxu0 %v1828
      %1874 = vmatpush.msra.mxu0 %v1827
      %1875 = vmatpush.msra.mxu0 %v1826
      %1876 = vmatpush.msra.mxu0 %v1825
      %1877 = vmatpush.msra.mxu0 %v1824
      %1878 = vmatpush.msra.mxu0 %v1823
      %1879 = vmatpush.msra.mxu0 %v1822
      %1880 = vmatpush.msra.mxu0 %v1821
      %1881 = vmatpush.msra.mxu0 %v1820
      %1882 = vmatpush.msra.mxu0 %v1819
      %1883 = vmatmul.f32.gmra.mxu0 %v1800
      %v1884 = vpop.f32.mrf.mxu0
      %v1885 = vadd.f32 0.0, %v1884
      %1886 = vmatmul.f32.gmra.mxu0 %v1796
      %v1887 = vpop.f32.mrf.mxu0
      %v1888 = vadd.f32 0.0, %v1887
      %1889 = vdwg.mxu0
      %1890 = vmatpush.msra.mxu0 %v1850
      %1891 = vmatpush.msra.mxu0 %v1849
      %1892 = vmatpush.msra.mxu0 %v1848
      %1893 = vmatpush.msra.mxu0 %v1847
      %1894 = vmatpush.msra.mxu0 %v1846
      %1895 = vmatpush.msra.mxu0 %v1845
      %1896 = vmatpush.msra.mxu0 %v1844
      %1897 = vmatpush.msra.mxu0 %v1843
      %1898 = vmatpush.msra.mxu0 %v1842
      %1899 = vmatpush.msra.mxu0 %v1841
      %1900 = vmatpush.msra.mxu0 %v1840
      %1901 = vmatpush.msra.mxu0 %v1839
      %1902 = vmatpush.msra.mxu0 %v1838
      %1903 = vmatpush.msra.mxu0 %v1837
      %1904 = vmatpush.msra.mxu0 %v1836
      %1905 = vmatpush.msra.mxu0 %v1835
      %1906 = vmatmul.f32.gmra.mxu0 %v1806
      %v1907 = vpop.f32.mrf.mxu0
      %v1908 = vadd.f32 %v1885, %v1907
      %1909 = vmatmul.f32.gmra.mxu0 %v1808
      %v1910 = vpop.f32.mrf.mxu0
      %v1911 = vadd.f32 %v1888, %v1910
      %1912 = vdwg.mxu0
      %1913 = vmatpush.msra.mxu0 %v1866
      %1914 = vmatpush.msra.mxu0 %v1865
      %1915 = vmatpush.msra.mxu0 %v1864
      %1916 = vmatpush.msra.mxu0 %v1863
      %1917 = vmatpush.msra.mxu0 %v1862
      %1918 = vmatpush.msra.mxu0 %v1861
      %1919 = vmatpush.msra.mxu0 %v1860
      %1920 = vmatpush.msra.mxu0 %v1859
      %1921 = vmatpush.msra.mxu0 %v1858
      %1922 = vmatpush.msra.mxu0 %v1857
      %1923 = vmatpush.msra.mxu0 %v1856
      %1924 = vmatpush.msra.mxu0 %v1855
      %1925 = vmatpush.msra.mxu0 %v1854
      %1926 = vmatpush.msra.mxu0 %v1853
      %1927 = vmatpush.msra.mxu0 %v1852
      %1928 = vmatpush.msra.mxu0 %v1851
      %1929 = vmatmul.f32.gmra.mxu0 %v1813
      %v1930 = vpop.f32.mrf.mxu0
      %v1931 = vadd.f32 %v1908, %v1930
      %1932 = vmatmul.f32.gmra.mxu0 %v1815
      %v1933 = vpop.f32.mrf.mxu0
      %v1934 = vadd.f32 %v1911, %v1933
      %1935 = vdwg.mxu0
      %v1936 = vperm.slane %v201, 3
      %v1937 = vmul.f32 %v1931, %v1936
      %v1938 = vmul.f32 %v1934, %v1936
      %v1939 = vperm.slane %v203, 3
      %v1940 = vadd.f32 %v1937, %v1939
      %v1941 = vadd.f32 %v1938, %v1939
      %v1942 = vmax.f32 %v1940, 0.0
      %v1943 = vmax.f32 %v1941, 0.0
      %v1946 = vrot.slane %v1942, 7
      %v1947 = vrot.slane %v1943, 7
      %v1948 = vsel %vm214, %v1946, %v1947
      %v1952 = vsel %vm214, 0.0, %v1946
      %v1953 = vsel %vm214, %v1947, 0.0
      %v1956 = vrot.slane %v1952, 1
      %v1957 = vrot.slane %v1948, 1
      %v1958 = vsel %vm225, %v1956, %v1957
      %v1959 = vrot.slane %v1953, 1
      %v1960 = vsel %vm225, %v1957, %v1959
      %v1963 = vrot.slane %v1952, 2
      %v1964 = vrot.slane %v1948, 2
      %v1965 = vsel %vm233, %v1963, %v1964
      %v1966 = vrot.slane %v1953, 2
      %v1967 = vsel %vm233, %v1964, %v1966
      %s1970 = scalar_lea.vmem %s1, 4224
      %v1971 = vld [vmem:[%s1970] sm:$0xff]
      %v1972 = vld [vmem:[%s1970 + $0x8] sm:$0xff]
      %v1973 = vld [vmem:[%s1970 + $0x10] sm:$0xff]
      %v1974 = vld [vmem:[%s1970 + $0x18] sm:$0xff]
      %v1975 = vld [vmem:[%s1970 + $0x20] sm:$0xff]
      %v1976 = vld [vmem:[%s1970 + $0x28] sm:$0xff]
      %v1977 = vld [vmem:[%s1970 + $0x30] sm:$0xff]
      %v1978 = vld [vmem:[%s1970 + $0x38] sm:$0xff]
      %v1979 = vld [vmem:[%s1970 + $0x40] sm:$0xff]
      %v1980 = vld [vmem:[%s1970 + $0x48] sm:$0xff]
      %v1981 = vld [vmem:[%s1970 + $0x50] sm:$0xff]
      %v1982 = vld [vmem:[%s1970 + $0x58] sm:$0xff]
      %v1983 = vld [vmem:[%s1970 + $0x60] sm:$0xff]
      %v1984 = vld [vmem:[%s1970 + $0x68] sm:$0xff]
      %v1985 = vld [vmem:[%s1970 + $0x70] sm:$0xff]
      %v1986 = vld [vmem:[%s1970 + $0x78] sm:$0xff]
      %v1987 = vld [vmem:[%s1970 + $0x80] sm:$0xff]
      %v1988 = vld [vmem:[%s1970 + $0x88] sm:$0xff]
      %v1989 = vld [vmem:[%s1970 + $0x90] sm:$0xff]
      %v1990 = vld [vmem:[%s1970 + $0x98] sm:$0xff]
      %v1991 = vld [vmem:[%s1970 + $0xa0] sm:$0xff]
      %v1992 = vld [vmem:[%s1970 + $0xa8] sm:$0xff]
      %v1993 = vld [vmem:[%s1970 + $0xb0] sm:$0xff]
      %v1994 = vld [vmem:[%s1970 + $0xb8] sm:$0xff]
      %v1995 = vld [vmem:[%s1970 + $0xc0] sm:$0xff]
      %v1996 = vld [vmem:[%s1970 + $0xc8] sm:$0xff]
      %v1997 = vld [vmem:[%s1970 + $0xd0] sm:$0xff]
      %v1998 = vld [vmem:[%s1970 + $0xd8] sm:$0xff]
      %v1999 = vld [vmem:[%s1970 + $0xe0] sm:$0xff]
      %v2000 = vld [vmem:[%s1970 + $0xe8] sm:$0xff]
      %v2001 = vld [vmem:[%s1970 + $0xf0] sm:$0xff]
      %v2002 = vld [vmem:[%s1970 + $0xf8] sm:$0xff]
      %v2003 = vld [vmem:[%s1970 + $0x100] sm:$0xff]
      %v2004 = vld [vmem:[%s1970 + $0x108] sm:$0xff]
      %v2005 = vld [vmem:[%s1970 + $0x110] sm:$0xff]
      %v2006 = vld [vmem:[%s1970 + $0x118] sm:$0xff]
      %v2007 = vld [vmem:[%s1970 + $0x120] sm:$0xff]
      %v2008 = vld [vmem:[%s1970 + $0x128] sm:$0xff]
      %v2009 = vld [vmem:[%s1970 + $0x130] sm:$0xff]
      %v2010 = vld [vmem:[%s1970 + $0x138] sm:$0xff]
      %v2011 = vld [vmem:[%s1970 + $0x140] sm:$0xff]
      %v2012 = vld [vmem:[%s1970 + $0x148] sm:$0xff]
      %v2013 = vld [vmem:[%s1970 + $0x150] sm:$0xff]
      %v2014 = vld [vmem:[%s1970 + $0x158] sm:$0xff]
      %v2015 = vld [vmem:[%s1970 + $0x160] sm:$0xff]
      %v2016 = vld [vmem:[%s1970 + $0x168] sm:$0xff]
      %v2017 = vld [vmem:[%s1970 + $0x170] sm:$0xff]
      %v2018 = vld [vmem:[%s1970 + $0x178] sm:$0xff]
      %2019 = vmatpush.msra.mxu0 %v1986
      %2020 = vmatpush.msra.mxu0 %v1985
      %2021 = vmatpush.msra.mxu0 %v1984
      %2022 = vmatpush.msra.mxu0 %v1983
      %2023 = vmatpush.msra.mxu0 %v1982
      %2024 = vmatpush.msra.mxu0 %v1981
      %2025 = vmatpush.msra.mxu0 %v1980
      %2026 = vmatpush.msra.mxu0 %v1979
      %2027 = vmatpush.msra.mxu0 %v1978
      %2028 = vmatpush.msra.mxu0 %v1977
      %2029 = vmatpush.msra.mxu0 %v1976
      %2030 = vmatpush.msra.mxu0 %v1975
      %2031 = vmatpush.msra.mxu0 %v1974
      %2032 = vmatpush.msra.mxu0 %v1973
      %2033 = vmatpush.msra.mxu0 %v1972
      %2034 = vmatpush.msra.mxu0 %v1971
      %2035 = vmatmul.f32.gmra.mxu0 %v1952
      %v2036 = vpop.f32.mrf.mxu0
      %v2037 = vadd.f32 0.0, %v2036
      %2038 = vmatmul.f32.gmra.mxu0 %v1948
      %v2039 = vpop.f32.mrf.mxu0
      %v2040 = vadd.f32 0.0, %v2039
      %2041 = vdwg.mxu0
      %2042 = vmatpush.msra.mxu0 %v2002
      %2043 = vmatpush.msra.mxu0 %v2001
      %2044 = vmatpush.msra.mxu0 %v2000
      %2045 = vmatpush.msra.mxu0 %v1999
      %2046 = vmatpush.msra.mxu0 %v1998
      %2047 = vmatpush.msra.mxu0 %v1997
      %2048 = vmatpush.msra.mxu0 %v1996
      %2049 = vmatpush.msra.mxu0 %v1995
      %2050 = vmatpush.msra.mxu0 %v1994
      %2051 = vmatpush.msra.mxu0 %v1993
      %2052 = vmatpush.msra.mxu0 %v1992
      %2053 = vmatpush.msra.mxu0 %v1991
      %2054 = vmatpush.msra.mxu0 %v1990
      %2055 = vmatpush.msra.mxu0 %v1989
      %2056 = vmatpush.msra.mxu0 %v1988
      %2057 = vmatpush.msra.mxu0 %v1987
      %2058 = vmatmul.f32.gmra.mxu0 %v1958
      %v2059 = vpop.f32.mrf.mxu0
      %v2060 = vadd.f32 %v2037, %v2059
      %2061 = vmatmul.f32.gmra.mxu0 %v1960
      %v2062 = vpop.f32.mrf.mxu0
      %v2063 = vadd.f32 %v2040, %v2062
      %2064 = vdwg.mxu0
      %2065 = vmatpush.msra.mxu0 %v2018
      %2066 = vmatpush.msra.mxu0 %v2017
      %2067 = vmatpush.msra.mxu0 %v2016
      %2068 = vmatpush.msra.mxu0 %v2015
      %2069 = vmatpush.msra.mxu0 %v2014
      %2070 = vmatpush.msra.mxu0 %v2013
      %2071 = vmatpush.msra.mxu0 %v2012
      %2072 = vmatpush.msra.mxu0 %v2011
      %2073 = vmatpush.msra.mxu0 %v2010
      %2074 = vmatpush.msra.mxu0 %v2009
      %2075 = vmatpush.msra.mxu0 %v2008
      %2076 = vmatpush.msra.mxu0 %v2007
      %2077 = vmatpush.msra.mxu0 %v2006
      %2078 = vmatpush.msra.mxu0 %v2005
      %2079 = vmatpush.msra.mxu0 %v2004
      %2080 = vmatpush.msra.mxu0 %v2003
      %2081 = vmatmul.f32.gmra.mxu0 %v1965
      %v2082 = vpop.f32.mrf.mxu0
      %v2083 = vadd.f32 %v2060, %v2082
      %2084 = vmatmul.f32.gmra.mxu0 %v1967
      %v2085 = vpop.f32.mrf.mxu0
      %v2086 = vadd.f32 %v2063, %v2085
      %2087 = vdwg.mxu0
      %v2088 = vmul.f32 %v505, 23.0
      %v2089 = vmul.f32 %v508, 23.0
      %v2090 = vmul.f32 %v813, 125.0
      %v2091 = vmul.f32 %v816, 125.0
      %v2092 = vadd.f32 %v2088, %v2090
      %v2093 = vadd.f32 %v2089, %v2091
      %v2094 = vmul.f32 %v1765, 81.0
      %v2095 = vmul.f32 %v1768, 81.0
      %v2096 = vsub.f32 %v2092, %v2094
      %v2097 = vsub.f32 %v2093, %v2095
      %v2098 = vmul.f32 %v2083, 125.0
      %v2099 = vmul.f32 %v2086, 125.0
      %v2100 = vadd.f32 %v2096, %v2098
      %v2101 = vadd.f32 %v2097, %v2099
      %v2102 = vmul.f32 %v2100, 0.0052083335
      %v2103 = vmul.f32 %v2101, 0.0052083335
      %v2104 = vadd.f32 %v2102, %v198
      %v2105 = vadd.f32 %v2103, %v199
      %v2106 = vmax.f32 %v2104, 0.0
      %v2107 = vmax.f32 %v2105, 0.0
      %2108 = vst [vmem:[%s197] sm:$0xff] %v2106
      %2109 = vst [vmem:[%s197 + $0x8] sm:$0xff] %v2107
      %p2110 = scmp.lt.s32.totalorder %s15, 1
      %s2111 = scalar_select %p2110, %s15, 1
      %s2112 = smul.addr %s2111, 2
      %s2113 = smul.addr %s2112, 8
      %s2114 = scalar_lea.vmem %s4, %s2113
      // Predicated region
      $region37: #{kutta_nys56_forward.1} parent=35 // pred_check
        %p2115 = pneg %p122
      $region38: #{kutta_nys56_forward.1} parent=35 // pred_check_branch
        %2117 = sbr.rel (%p2115) target = $region40
      $region39: #{kutta_nys56_forward.1} parent=35 // pred_region
        _
      $region40: #{kutta_nys56_forward.1} parent=35 // pred_fallthru
        _
    $region36: #{kutta_nys56_forward.1} parent=5 // pred_fallthru
      _
    %p2118 = scmp.le.s32.totalorder 2, %s10
    // Predicated region
    $region41: #{kutta_nys56_forward.1} parent=5 // pred_check
      %p2119 = pneg %p2118
    $region42: #{kutta_nys56_forward.1} parent=5 // pred_check_branch
      %2121 = sbr.rel (%p2119) target = $region44
    $region43: #{kutta_nys56_forward.1} parent=5 // pred_region
      %s2122 = ssub.s32 %s10, 2
      // Predicated region
      $region45: #{kutta_nys56_forward.1} parent=43 // pred_check
        %p2123 = pneg %p128
      $region46: #{kutta_nys56_forward.1} parent=43 // pred_check_branch
        %2125 = sbr.rel (%p2123) target = $region48
      $region47: #{kutta_nys56_forward.1} parent=43 // pred_region
        %p2126 = scmp.lt.s32.totalorder %s16, 1
        %s2127 = scalar_select %p2126, %s16, 1
        %s2128 = smul.addr %s2127, 2
        %s2129 = smul.addr %s2128, 8
        %s2130 = scalar_lea.vmem %s4, %s2129
      $region48: #{kutta_nys56_forward.1} parent=43 // pred_fallthru
        _
    $region44: #{kutta_nys56_forward.1} parent=5 // pred_fallthru
      _
  $region6: #{kutta_nys56_forward.1} parent=0 // loop_footer
    %s14 = sadd.s32 1, %s10
  $region7: #{kutta_nys56_forward.1} parent=0 // loop_footer_branch
    %9 = sbr.rel target = $region3
  $region8: #{kutta_nys56_forward.1} parent=0 // loop_exit
    _

</llo_original>
